<compile_context>
chip_gen: v5e
topology: v5e:2x2
jax: 0.10.0
libtpu: 0.0.40
codegen_flags: <defaults>
</compile_context>

<pallas_src>
import functools
import math

import jax
import jax.numpy as jnp
from jax.experimental import pallas as pl
from jax.experimental.pallas import tpu as pltpu

NEG_SLOPE = 0.2   # LeakyReLU(0.2)
BN_EPS = 1e-5


def _leaky(x):
    return jnp.where(x > 0, x, NEG_SLOPE * x)


# ----------------------------------------------------------------------------
# Fused forward kernel.  Grid = (num_batch_tiles,), everything resident in VMEM.
#   inputs : x (T, TB, In) f32, LSTM weights (gate-reordered, transposed, bf16),
#            h0/c0 (L, TB, H), features + folded MLP weights, split fc_out
#   outputs: y (TB, O), hN (L, TB, H), cN (L, TB, H)
#   scratch: xg   (T*TB, 4H) f32  -- hoisted layer-0 input projection
#            hseq (TB, T*H) f32   -- top-layer h_t sequence for deferred fc_out
# ----------------------------------------------------------------------------
def fused_forward_kernel(x_ref, wih0_ref, whh0_ref, wcat_ref, b_ref,
                         h0_ref, c0_ref,
                         feat_ref, w_in_ref, b_in_ref, hl_w_ref, hl_b_ref,
                         w_out_seq_ref, w_out_feat_ref, b_out_ref,
                         y_ref, hN_ref, cN_ref,
                         xg_scr, hseq_scr,
                         *, T, TB, H, L, HL, O):
    f32 = jnp.float32
    bf16 = jnp.bfloat16

    # ---- layer-0 input projection for ALL timesteps: one bf16 MXU matmul ----
    x_flat = x_ref[...].reshape(T * TB, x_ref.shape[2])        # no-op collapse
    xg_scr[...] = (jnp.dot(x_flat.astype(bf16), wih0_ref[...],
                           preferred_element_type=f32)
                   + b_ref[0])                                 # (T*TB, 4H) f32

    # ---- feature MLP (independent of recurrence; eval-mode BN pre-folded) ---
    feat = _leaky(jnp.dot(feat_ref[...], w_in_ref[...],
                          preferred_element_type=f32) + b_in_ref[...])
    for l in range(HL):
        feat = _leaky(jnp.dot(feat, hl_w_ref[l],
                              preferred_element_type=f32) + hl_b_ref[l])
    # TODO(synk): Dropout layers are identity (eval-mode semantics only).

    # fc_out contribution of the feature branch (+ bias), accumulated in f32.
    y_feat = (jnp.dot(feat, w_out_feat_ref[...], preferred_element_type=f32)
              + b_out_ref[...])                                # (TB, O)

    # ---- fused multi-layer LSTM recurrence, fully unrolled (small T) --------
    # TODO(synk): for T >~ 32 switch to lax.fori_loop(unroll=4..8) and chunk
    #             xg_scr over time (double buffer) to bound VMEM on v7x.
    whh0 = whh0_ref[...]                                       # (H, 4H) bf16
    wcat = [wcat_ref[l] for l in range(L - 1)]                 # (2H, 4H) bf16
    b_g = [b_ref[l] for l in range(1, L)]                      # (1, 4H) f32
    hs = [h0_ref[l] for l in range(L)]
    cs = [c0_ref[l] for l in range(L)]
    hbf = [h.astype(bf16) for h in hs]

    for t in range(T):
        xg = xg_scr[pl.ds(t * TB, TB), :]          # (TB, 4H) incl. layer-0 bias
        layer_in = None
        for l in range(L):
            if l == 0:
                gates = xg + jnp.dot(hbf[0], whh0, preferred_element_type=f32)
            else:
                # fused input+recurrent matmul: (TB, 2H) x (2H, 4H)
                inp = jnp.concatenate([layer_in, hbf[l]], axis=-1)
                gates = (jnp.dot(inp, wcat[l - 1], preferred_element_type=f32)
                         + b_g[l - 1])
            # gate columns reordered to [i, f, o, g] at preprocessing:
            sig = jax.nn.sigmoid(gates[:, :3 * H])   # i | f | o  (contiguous)
            g_g = jnp.tanh(gates[:, 3 * H:])         # g
            c_new = sig[:, H:2 * H] * cs[l] + sig[:, :H] * g_g
            h_new = sig[:, 2 * H:3 * H] * jnp.tanh(c_new)
            hs[l] = h_new
            cs[l] = c_new
            hbf[l] = h_new.astype(bf16)
            layer_in = hbf[l]
            # TODO(synk): inter-layer LSTM dropout (training mode) not applied.
        # stash top-layer h_t; fc_out is applied once after the loop
        hseq_scr[:, t * H:(t + 1) * H] = hs[L - 1]

    # ---- deferred fc_out over the whole sequence: one K=T*H bf16 matmul -----
    hflat = hseq_scr[...].astype(bf16)                          # (TB, T*H)
    y_ref[...] = y_feat + jnp.dot(hflat, w_out_seq_ref[...],
                                  preferred_element_type=f32)
    for l in range(L):
        hN_ref[l] = hs[l]
        cN_ref[l] = cs[l]


# ----------------------------------------------------------------------------
# One-time parameter preprocessing (transposes, gate reorder, bias fusion,
# W_ih/W_hh stacking for l>=1, eval-mode BatchNorm folding, fc_out split,
# bf16 casting of matmul weights).  Done OUTSIDE the jitted forward.
# ----------------------------------------------------------------------------
def preprocess_params(params, cfg):
    H = cfg["hidden_size"]
    L, HL = cfg["num_layers"], cfg["hidden_layers"]
    T, O = cfg["max_length"], cfg["out_size"]
    bf16, f32 = jnp.bfloat16, jnp.float32

    def reorder(a):  # gate blocks on last axis: [i, f, g, o] -> [i, f, o, g]
        return jnp.concatenate([a[..., :2 * H], a[..., 3 * H:],
                                a[..., 2 * H:3 * H]], axis=-1)

    prep = {}
    prep["wih0"] = reorder(params["w_ih_0"].T).astype(bf16)          # (In, 4H)
    prep["whh0"] = reorder(params["w_hh_0"].T).astype(bf16)          # (H, 4H)
    b, wcat = [], []
    for l in range(L):
        b.append(reorder(params[f"b_ih_{l}"] + params[f"b_hh_{l}"])[None, :])
        if l >= 1:
            wcat.append(jnp.concatenate(
                [reorder(params[f"w_ih_{l}"].T),
                 reorder(params[f"w_hh_{l}"].T)], axis=0))           # (2H, 4H)
    prep["b"] = jnp.stack(b).astype(f32)                             # (L, 1, 4H)
    prep["wcat"] = (jnp.stack(wcat).astype(bf16) if wcat
                    else jnp.zeros((1, 2 * H, 4 * H), bf16))

    prep["w_in"] = params["w_in"].T.astype(f32)                      # (NF, H)
    prep["b_in"] = params["b_in"][None, :].astype(f32)               # (1, H)
    hw, hb = [], []
    for l in range(HL):
        scale = params[f"bn_g_{l}"] * jax.lax.rsqrt(params[f"bn_v_{l}"] + BN_EPS)
        hw.append(params[f"hl_w_{l}"].T * scale[None, :])            # (H, H)
        hb.append(((params[f"hl_b_{l}"] - params[f"bn_m_{l}"]) * scale
                   + params[f"bn_b_{l}"])[None, :])                  # (1, H)
    prep["hl_w"] = (jnp.stack(hw).astype(f32) if HL
                    else jnp.zeros((1, H, H), f32))
    prep["hl_b"] = (jnp.stack(hb).astype(f32) if HL
                    else jnp.zeros((1, 1, H), f32))

    w_out_t = params["w_out"].T                                      # (T*H+H, O)
    prep["w_out_seq"] = w_out_t[:T * H].astype(bf16)                 # (T*H, O)
    prep["w_out_feat"] = w_out_t[T * H:].astype(f32)                 # (H, O)
    prep["b_out"] = params["b_out"][None, :].astype(f32)             # (1, O)
    return prep


def _num_batch_tiles(Bp):
    # TODO(synk): crude v7x (2 TensorCores/chip) detection via device_kind;
    # single tile on v5e/v6e avoids serializing the recurrence across tiles.
    try:
        kind = jax.devices()[0].device_kind.lower()
    except Exception:
        kind = ""
    if "7" in kind and Bp >= 16 and Bp % 16 == 0:
        return 2
    return 1


def _nbytes(shape, dtype):
    return math.prod(shape) * jnp.dtype(dtype).itemsize


# ----------------------------------------------------------------------------
# Forward wrapper: pads batch to a multiple of 8, launches ONE fused kernel
# over a (possibly 1-long) batch-tile grid, slices the padding back off.
# ----------------------------------------------------------------------------
def forward(prep, x, hidden, features, cfg):
    T, H = cfg["max_length"], cfg["hidden_size"]
    L, HL = cfg["num_layers"], cfg["hidden_layers"]
    In, O, NF = cfg["input_size"], cfg["out_size"], cfg["num_features"]
    B = x.shape[0]
    Bp = max(8, ((B + 7) // 8) * 8)              # sublane-align the batch
    pad = Bp - B
    nb = _num_batch_tiles(Bp)
    TB = Bp // nb

    h0, c0 = hidden
    xp = jnp.pad(x, ((0, pad), (0, 0), (0, 0)))
    fp = jnp.pad(features, ((0, pad), (0, 0)))
    h0p = jnp.pad(h0, ((0, 0), (0, pad), (0, 0)))
    c0p = jnp.pad(c0, ((0, 0), (0, pad), (0, 0)))

    x_tm = jnp.transpose(xp, (1, 0, 2))          # (T, Bp, In), time-major, f32

    kernel = functools.partial(fused_forward_kernel,
                               T=T, TB=TB, H=H, L=L, HL=HL, O=O)

    in_specs = [
        pl.BlockSpec((T, TB, In), lambda i: (0, i, 0)),            # x
        pl.BlockSpec((In, 4 * H), lambda i: (0, 0)),               # wih0
        pl.BlockSpec((H, 4 * H), lambda i: (0, 0)),                # whh0
        pl.BlockSpec(prep["wcat"].shape, lambda i: (0, 0, 0)),     # wcat
        pl.BlockSpec((L, 1, 4 * H), lambda i: (0, 0, 0)),          # b
        pl.BlockSpec((L, TB, H), lambda i: (0, i, 0)),             # h0
        pl.BlockSpec((L, TB, H), lambda i: (0, i, 0)),             # c0
        pl.BlockSpec((TB, NF), lambda i: (i, 0)),                  # features
        pl.BlockSpec((NF, H), lambda i: (0, 0)),                   # w_in
        pl.BlockSpec((1, H), lambda i: (0, 0)),                    # b_in
        pl.BlockSpec(prep["hl_w"].shape, lambda i: (0, 0, 0)),     # hl_w
        pl.BlockSpec(prep["hl_b"].shape, lambda i: (0, 0, 0)),     # hl_b
        pl.BlockSpec((T * H, O), lambda i: (0, 0)),                # w_out_seq
        pl.BlockSpec((H, O), lambda i: (0, 0)),                    # w_out_feat
        pl.BlockSpec((1, O), lambda i: (0, 0)),                    # b_out
    ]
    out_specs = (
        pl.BlockSpec((TB, O), lambda i: (i, 0)),                   # y
        pl.BlockSpec((L, TB, H), lambda i: (0, i, 0)),             # hN
        pl.BlockSpec((L, TB, H), lambda i: (0, i, 0)),             # cN
    )
    scratch_shapes = [pltpu.VMEM((T * TB, 4 * H), jnp.float32),
                      pltpu.VMEM((TB, T * H), jnp.float32)]

    # VMEM budget from actual per-block footprint (double-buffered blocks +
    # scratch + margin), capped at 48 MiB so it stays under v7x's 64 MiB.
    block_bytes = (
        _nbytes((T, TB, In), jnp.float32)
        + _nbytes(prep["wih0"].shape, jnp.bfloat16)
        + _nbytes(prep["whh0"].shape, jnp.bfloat16)
        + _nbytes(prep["wcat"].shape, jnp.bfloat16)
        + _nbytes(prep["b"].shape, jnp.float32)
        + 2 * _nbytes((L, TB, H), jnp.float32)
        + _nbytes((TB, NF), jnp.float32)
        + _nbytes(prep["w_in"].shape, jnp.float32)
        + _nbytes(prep["b_in"].shape, jnp.float32)
        + _nbytes(prep["hl_w"].shape, jnp.float32)
        + _nbytes(prep["hl_b"].shape, jnp.float32)
        + _nbytes(prep["w_out_seq"].shape, jnp.bfloat16)
        + _nbytes(prep["w_out_feat"].shape, jnp.float32)
        + _nbytes(prep["b_out"].shape, jnp.float32)
        + _nbytes((TB, O), jnp.float32)
        + 2 * _nbytes((L, TB, H), jnp.float32))
    scratch_bytes = sum(_nbytes(s, jnp.float32)
                        for s in [(T * TB, 4 * H), (TB, T * H)])
    vmem_budget = min(max(2 * block_bytes + scratch_bytes + (4 << 20),
                          16 << 20), 48 << 20)

    y, hN, cN = pl.pallas_call(
        kernel,
        out_shape=(jax.ShapeDtypeStruct((Bp, O), jnp.float32),
                   jax.ShapeDtypeStruct((L, Bp, H), jnp.float32),
                   jax.ShapeDtypeStruct((L, Bp, H), jnp.float32)),
        grid_spec=pltpu.PrefetchScalarGridSpec(
            num_scalar_prefetch=0,
            grid=(nb,),
            in_specs=in_specs,
            out_specs=out_specs,
            scratch_shapes=scratch_shapes),
        compiler_params=pltpu.CompilerParams(
            dimension_semantics=("parallel",),      # batch tiles -> v7x cores
            vmem_limit_bytes=int(vmem_budget)),
    )(x_tm, prep["wih0"], prep["whh0"], prep["wcat"], prep["b"],
      h0p, c0p, fp, prep["w_in"], prep["b_in"], prep["hl_w"], prep["hl_b"],
      prep["w_out_seq"], prep["w_out_feat"], prep["b_out"])

    # TODO(synk): bidirectional=True path not implemented (module used with False).
    return y[:B], (hN[:, :B], cN[:, :B])


# ----------------------------------------------------------------------------
# Pure-JAX f32 reference (same math, original parameter layout) for checking.
# ----------------------------------------------------------------------------
def ref_forward(params, x, hidden, features, cfg):
    H = cfg["hidden_size"]
    h0, c0 = hidden
    layer_in = jnp.transpose(x, (1, 0, 2))
    h_out, c_out = [], []
    for l in range(cfg["num_layers"]):
        w_ih, w_hh = params[f"w_ih_{l}"], params[f"w_hh_{l}"]
        b = (params[f"b_ih_{l}"] + params[f"b_hh_{l}"])[None, :]
        h, c = h0[l], c0[l]
        outs = []
        for t in range(layer_in.shape[0]):
            g = layer_in[t] @ w_ih.T + h @ w_hh.T + b
            i = jax.nn.sigmoid(g[:, :H])
            f = jax.nn.sigmoid(g[:, H:2 * H])
            gg = jnp.tanh(g[:, 2 * H:3 * H])
            o = jax.nn.sigmoid(g[:, 3 * H:])
            c = f * c + i * gg
            h = o * jnp.tanh(c)
            outs.append(h)
        layer_in = jnp.stack(outs)
        h_out.append(h)
        c_out.append(c)
    all_outputs = jnp.transpose(layer_in, (1, 0, 2)).reshape(x.shape[0], -1)

    feat = _leaky(features @ params["w_in"].T + params["b_in"])
    for l in range(cfg["hidden_layers"]):
        y = feat @ params[f"hl_w_{l}"].T + params[f"hl_b_{l}"]
        y = ((y - params[f"bn_m_{l}"]) / jnp.sqrt(params[f"bn_v_{l}"] + BN_EPS)
             * params[f"bn_g_{l}"] + params[f"bn_b_{l}"])
        feat = _leaky(y)

    cat = jnp.concatenate([all_outputs, feat], axis=1)
    y = cat @ params["w_out"].T + params["b_out"]
    return y, (jnp.stack(h_out), jnp.stack(c_out))


# ----------------------------------------------------------------------------
# Deterministic parameter init (PyTorch-style uniform(-1/sqrt(H), 1/sqrt(H))).
# ----------------------------------------------------------------------------
def init_params(key, cfg):
    In, H = cfg["input_size"], cfg["hidden_size"]
    L, HL = cfg["num_layers"], cfg["hidden_layers"]
    NF, T, O = cfg["num_features"], cfg["max_length"], cfg["out_size"]
    k = 1.0 / jnp.sqrt(H)

    def u(key, shape):
        return jax.random.uniform(key, shape, jnp.float32, -k, k)

    params = {}
    keys = jax.random.split(key, 4 * L + 2 + 2 * HL + 2)
    ki = iter(keys)
    for l in range(L):
        in_l = In if l == 0 else H
        params[f"w_ih_{l}"] = u(next(ki), (4 * H, in_l))
        params[f"w_hh_{l}"] = u(next(ki), (4 * H, H))
        params[f"b_ih_{l}"] = u(next(ki), (4 * H,))
        params[f"b_hh_{l}"] = u(next(ki), (4 * H,))
    params["w_in"] = u(next(ki), (H, NF))
    params["b_in"] = u(next(ki), (H,))
    for l in range(HL):
        params[f"hl_w_{l}"] = u(next(ki), (H, H))
        params[f"hl_b_{l}"] = u(next(ki), (H,))
        params[f"bn_g_{l}"] = jnp.ones((H,), jnp.float32)
        params[f"bn_b_{l}"] = jnp.zeros((H,), jnp.float32)
        params[f"bn_m_{l}"] = jnp.zeros((H,), jnp.float32)
        params[f"bn_v_{l}"] = jnp.ones((H,), jnp.float32)
    params["w_out"] = u(next(ki), (O, H * 1 * T + H))   # bidirectional=False
    params["b_out"] = u(next(ki), (O,))
    return params


if __name__ == "__main__":
    cfg = dict(input_size=8, hidden_size=32, num_layers=2, out_size=4,
               num_features=16, max_length=8, hidden_layers=2,
               bidirectional=False)
    B, T = 4, cfg["max_length"]

    key = jax.random.PRNGKey(0)
    kp, kx, kf = jax.random.split(key, 3)
    params = init_params(kp, cfg)
    prep = preprocess_params(params, cfg)

    x = jax.random.normal(kx, (B, T, cfg["input_size"]), jnp.float32)
    features = jax.random.normal(kf, (B, cfg["num_features"]), jnp.float32)
    h0 = jnp.zeros((cfg["num_layers"], B, cfg["hidden_size"]), jnp.float32)
    c0 = jnp.zeros((cfg["num_layers"], B, cfg["hidden_size"]), jnp.float32)

    fwd = jax.jit(functools.partial(forward, cfg=cfg))
    y, (hN, cN) = fwd(prep, x, (h0, c0), features)
    jax.block_until_ready((y, hN, cN))

    y_ref, (hN_ref, cN_ref) = ref_forward(params, x, (h0, c0), features, cfg)
    assert y.shape == (B, cfg["out_size"])
    assert hN.shape == (cfg["num_layers"], B, cfg["hidden_size"])
    assert cN.shape == (cfg["num_layers"], B, cfg["hidden_size"])
    # bf16 matmul operands (f32 accumulation / gate math) -> slightly looser tol
    assert jnp.allclose(y, y_ref, atol=2e-2, rtol=2e-2)
    assert jnp.allclose(hN, hN_ref, atol=2e-2, rtol=2e-2)
    assert jnp.allclose(cN, cN_ref, atol=2e-2, rtol=2e-2)

    print("KERNEL_OK")
</pallas_src>

<mosaic_0001>
module attributes {stable_mosaic.version = 11 : i64} {
  func.func @fused_forward_kernel(%arg0: i32, %arg1: memref<8x8x8xf32, #tpu.memory_space<vmem>>, %arg2: memref<8x128xbf16, #tpu.memory_space<vmem>>, %arg3: memref<32x128xbf16, #tpu.memory_space<vmem>>, %arg4: memref<1x64x128xbf16, #tpu.memory_space<vmem>>, %arg5: memref<2x1x128xf32, #tpu.memory_space<vmem>>, %arg6: memref<2x8x32xf32, #tpu.memory_space<vmem>>, %arg7: memref<2x8x32xf32, #tpu.memory_space<vmem>>, %arg8: memref<8x16xf32, #tpu.memory_space<vmem>>, %arg9: memref<16x32xf32, #tpu.memory_space<vmem>>, %arg10: memref<1x32xf32, #tpu.memory_space<vmem>>, %arg11: memref<2x32x32xf32, #tpu.memory_space<vmem>>, %arg12: memref<2x1x32xf32, #tpu.memory_space<vmem>>, %arg13: memref<256x4xbf16, #tpu.memory_space<vmem>>, %arg14: memref<32x4xf32, #tpu.memory_space<vmem>>, %arg15: memref<1x4xf32, #tpu.memory_space<vmem>>, %arg16: memref<8x4xf32, #tpu.memory_space<vmem>>, %arg17: memref<2x8x32xf32, #tpu.memory_space<vmem>>, %arg18: memref<2x8x32xf32, #tpu.memory_space<vmem>>, %arg19: memref<64x128xf32, #tpu.memory_space<vmem>>, %arg20: memref<8x256xf32, #tpu.memory_space<vmem>>) attributes {dimension_semantics = [#tpu.dimension_semantics<parallel>], iteration_bounds = array<i64: 1>, scalar_prefetch = 0 : i64, scratch_operands = 2 : i64, tpu.core_type = #tpu.core_type<tc>, window_params = [{transform_indices = @transform_0, window_bounds = array<i64: 8, 8, 8>}, {pipeline_mode = #tpu.pipeline_mode<synchronous>, transform_indices = @transform_1, window_bounds = array<i64: 8, 128>}, {pipeline_mode = #tpu.pipeline_mode<synchronous>, transform_indices = @transform_2, window_bounds = array<i64: 32, 128>}, {pipeline_mode = #tpu.pipeline_mode<synchronous>, transform_indices = @transform_3, window_bounds = array<i64: 1, 64, 128>}, {pipeline_mode = #tpu.pipeline_mode<synchronous>, transform_indices = @transform_4, window_bounds = array<i64: 2, 1, 128>}, {transform_indices = @transform_5, window_bounds = array<i64: 2, 8, 32>}, {transform_indices = @transform_6, window_bounds = array<i64: 2, 8, 32>}, {transform_indices = @transform_7, window_bounds = array<i64: 8, 16>}, {pipeline_mode = #tpu.pipeline_mode<synchronous>, transform_indices = @transform_8, window_bounds = array<i64: 16, 32>}, {pipeline_mode = #tpu.pipeline_mode<synchronous>, transform_indices = @transform_9, window_bounds = array<i64: 1, 32>}, {pipeline_mode = #tpu.pipeline_mode<synchronous>, transform_indices = @transform_10, window_bounds = array<i64: 2, 32, 32>}, {pipeline_mode = #tpu.pipeline_mode<synchronous>, transform_indices = @transform_11, window_bounds = array<i64: 2, 1, 32>}, {pipeline_mode = #tpu.pipeline_mode<synchronous>, transform_indices = @transform_12, window_bounds = array<i64: 256, 4>}, {pipeline_mode = #tpu.pipeline_mode<synchronous>, transform_indices = @transform_13, window_bounds = array<i64: 32, 4>}, {pipeline_mode = #tpu.pipeline_mode<synchronous>, transform_indices = @transform_14, window_bounds = array<i64: 1, 4>}, {transform_indices = @transform_15, window_bounds = array<i64: 8, 4>}, {transform_indices = @transform_16, window_bounds = array<i64: 2, 8, 32>}, {transform_indices = @transform_17, window_bounds = array<i64: 2, 8, 32>}]} {
    %c0 = arith.constant 0 : index
    %c0_0 = arith.constant 0 : index
    %c0_1 = arith.constant 0 : index
    %0 = vector.load %arg1[%c0, %c0_0, %c0_1] : memref<8x8x8xf32, #tpu.memory_space<vmem>>, vector<8x8x8xf32>
    %1 = vector.shape_cast %0 : vector<8x8x8xf32> to vector<64x8xf32>
    %2 = arith.truncf %1 : vector<64x8xf32> to vector<64x8xbf16>
    %c0_2 = arith.constant 0 : index
    %c0_3 = arith.constant 0 : index
    %3 = vector.load %arg2[%c0_2, %c0_3] : memref<8x128xbf16, #tpu.memory_space<vmem>>, vector<8x128xbf16>
    %cst = arith.constant dense<0.000000e+00> : vector<64x128xf32>
    %4 = tpu.matmul %2, %3, %cst {dimension_numbers = #tpu.dot_dimension_numbers<[1], [0], [0], [1], [0, 0, 1, 1], [], []>} : vector<64x8xbf16>, vector<8x128xbf16>, vector<64x128xf32> -> vector<64x128xf32>
    %c0_4 = arith.constant 0 : index
    %c0_5 = arith.constant 0 : index
    %c0_6 = arith.constant 0 : index
    %5 = vector.load %arg5[%c0_4, %c0_5, %c0_6] : memref<2x1x128xf32, #tpu.memory_space<vmem>>, vector<1x1x128xf32>
    %6 = vector.shape_cast %5 : vector<1x1x128xf32> to vector<1x128xf32>
    %7 = vector.broadcast %6 : vector<1x128xf32> to vector<64x128xf32>
    %8 = arith.addf %4, %7 : vector<64x128xf32>
    %c0_7 = arith.constant 0 : index
    %c0_8 = arith.constant 0 : index
    %9 = vector.load %arg19[%c0_7, %c0_8] : memref<64x128xf32, #tpu.memory_space<vmem>>, vector<64x128xf32>
    tpu.vector_store %arg19[%c0_7, %c0_8], %8 {strides = array<i32>} : memref<64x128xf32, #tpu.memory_space<vmem>>, vector<64x128xf32>,
    %c0_9 = arith.constant 0 : index
    %c0_10 = arith.constant 0 : index
    %10 = vector.load %arg8[%c0_9, %c0_10] : memref<8x16xf32, #tpu.memory_space<vmem>>, vector<8x16xf32>
    %c0_11 = arith.constant 0 : index
    %c0_12 = arith.constant 0 : index
    %11 = vector.load %arg9[%c0_11, %c0_12] : memref<16x32xf32, #tpu.memory_space<vmem>>, vector<16x32xf32>
    %cst_13 = arith.constant dense<0.000000e+00> : vector<8x32xf32>
    %12 = tpu.matmul %10, %11, %cst_13 {dimension_numbers = #tpu.dot_dimension_numbers<[1], [0], [0], [1], [0, 0, 1, 1], [], []>} : vector<8x16xf32>, vector<16x32xf32>, vector<8x32xf32> -> vector<8x32xf32>
    %c0_14 = arith.constant 0 : index
    %c0_15 = arith.constant 0 : index
    %13 = vector.load %arg10[%c0_14, %c0_15] : memref<1x32xf32, #tpu.memory_space<vmem>>, vector<1x32xf32>
    %14 = vector.broadcast %13 : vector<1x32xf32> to vector<8x32xf32>
    %15 = arith.addf %12, %14 : vector<8x32xf32>
    %cst_16 = arith.constant 0.000000e+00 : f32
    %16 = vector.broadcast %cst_16 : f32 to vector<8x32xf32>
    %17 = arith.cmpf ogt, %15, %16 : vector<8x32xf32>
    %cst_17 = arith.constant 2.000000e-01 : f32
    %18 = vector.broadcast %cst_17 : f32 to vector<8x32xf32>
    %19 = arith.mulf %18, %15 : vector<8x32xf32>
    %20 = arith.select %17, %15, %19 : vector<8x32xi1>, vector<8x32xf32>
    %c0_18 = arith.constant 0 : index
    %c0_19 = arith.constant 0 : index
    %c0_20 = arith.constant 0 : index
    %21 = vector.load %arg11[%c0_18, %c0_19, %c0_20] : memref<2x32x32xf32, #tpu.memory_space<vmem>>, vector<1x32x32xf32>
    %22 = vector.shape_cast %21 : vector<1x32x32xf32> to vector<32x32xf32>
    %cst_21 = arith.constant dense<0.000000e+00> : vector<8x32xf32>
    %23 = tpu.matmul %20, %22, %cst_21 {dimension_numbers = #tpu.dot_dimension_numbers<[1], [0], [0], [1], [0, 0, 1, 1], [], []>} : vector<8x32xf32>, vector<32x32xf32>, vector<8x32xf32> -> vector<8x32xf32>
    %c0_22 = arith.constant 0 : index
    %c0_23 = arith.constant 0 : index
    %c0_24 = arith.constant 0 : index
    %24 = vector.load %arg12[%c0_22, %c0_23, %c0_24] : memref<2x1x32xf32, #tpu.memory_space<vmem>>, vector<1x1x32xf32>
    %25 = vector.shape_cast %24 : vector<1x1x32xf32> to vector<1x32xf32>
    %26 = vector.broadcast %25 : vector<1x32xf32> to vector<8x32xf32>
    %27 = arith.addf %23, %26 : vector<8x32xf32>
    %cst_25 = arith.constant 0.000000e+00 : f32
    %28 = vector.broadcast %cst_25 : f32 to vector<8x32xf32>
    %29 = arith.cmpf ogt, %27, %28 : vector<8x32xf32>
    %cst_26 = arith.constant 2.000000e-01 : f32
    %30 = vector.broadcast %cst_26 : f32 to vector<8x32xf32>
    %31 = arith.mulf %30, %27 : vector<8x32xf32>
    %32 = arith.select %29, %27, %31 : vector<8x32xi1>, vector<8x32xf32>
    %c1 = arith.constant 1 : index
    %c0_27 = arith.constant 0 : index
    %c0_28 = arith.constant 0 : index
    %33 = vector.load %arg11[%c1, %c0_27, %c0_28] : memref<2x32x32xf32, #tpu.memory_space<vmem>>, vector<1x32x32xf32>
    %34 = vector.shape_cast %33 : vector<1x32x32xf32> to vector<32x32xf32>
    %cst_29 = arith.constant dense<0.000000e+00> : vector<8x32xf32>
    %35 = tpu.matmul %32, %34, %cst_29 {dimension_numbers = #tpu.dot_dimension_numbers<[1], [0], [0], [1], [0, 0, 1, 1], [], []>} : vector<8x32xf32>, vector<32x32xf32>, vector<8x32xf32> -> vector<8x32xf32>
    %c1_30 = arith.constant 1 : index
    %c0_31 = arith.constant 0 : index
    %c0_32 = arith.constant 0 : index
    %36 = vector.load %arg12[%c1_30, %c0_31, %c0_32] : memref<2x1x32xf32, #tpu.memory_space<vmem>>, vector<1x1x32xf32>
    %37 = vector.shape_cast %36 : vector<1x1x32xf32> to vector<1x32xf32>
    %38 = vector.broadcast %37 : vector<1x32xf32> to vector<8x32xf32>
    %39 = arith.addf %35, %38 : vector<8x32xf32>
    %cst_33 = arith.constant 0.000000e+00 : f32
    %40 = vector.broadcast %cst_33 : f32 to vector<8x32xf32>
    %41 = arith.cmpf ogt, %39, %40 : vector<8x32xf32>
    %cst_34 = arith.constant 2.000000e-01 : f32
    %42 = vector.broadcast %cst_34 : f32 to vector<8x32xf32>
    %43 = arith.mulf %42, %39 : vector<8x32xf32>
    %44 = arith.select %41, %39, %43 : vector<8x32xi1>, vector<8x32xf32>
    %c0_35 = arith.constant 0 : index
    %c0_36 = arith.constant 0 : index
    %45 = vector.load %arg14[%c0_35, %c0_36] : memref<32x4xf32, #tpu.memory_space<vmem>>, vector<32x4xf32>
    %cst_37 = arith.constant dense<0.000000e+00> : vector<8x4xf32>
    %46 = tpu.matmul %44, %45, %cst_37 {dimension_numbers = #tpu.dot_dimension_numbers<[1], [0], [0], [1], [0, 0, 1, 1], [], []>} : vector<8x32xf32>, vector<32x4xf32>, vector<8x4xf32> -> vector<8x4xf32>
    %c0_38 = arith.constant 0 : index
    %c0_39 = arith.constant 0 : index
    %47 = vector.load %arg15[%c0_38, %c0_39] : memref<1x4xf32, #tpu.memory_space<vmem>>, vector<1x4xf32>
    %48 = vector.broadcast %47 : vector<1x4xf32> to vector<8x4xf32>
    %49 = arith.addf %46, %48 : vector<8x4xf32>
    %c0_40 = arith.constant 0 : index
    %c0_41 = arith.constant 0 : index
    %50 = vector.load %arg3[%c0_40, %c0_41] : memref<32x128xbf16, #tpu.memory_space<vmem>>, vector<32x128xbf16>
    %c0_42 = arith.constant 0 : index
    %c0_43 = arith.constant 0 : index
    %c0_44 = arith.constant 0 : index
    %51 = vector.load %arg4[%c0_42, %c0_43, %c0_44] : memref<1x64x128xbf16, #tpu.memory_space<vmem>>, vector<1x64x128xbf16>
    %52 = vector.shape_cast %51 : vector<1x64x128xbf16> to vector<64x128xbf16>
    %c1_45 = arith.constant 1 : index
    %c0_46 = arith.constant 0 : index
    %c0_47 = arith.constant 0 : index
    %53 = vector.load %arg5[%c1_45, %c0_46, %c0_47] : memref<2x1x128xf32, #tpu.memory_space<vmem>>, vector<1x1x128xf32>
    %54 = vector.shape_cast %53 : vector<1x1x128xf32> to vector<1x128xf32>
    %c0_48 = arith.constant 0 : index
    %c0_49 = arith.constant 0 : index
    %c0_50 = arith.constant 0 : index
    %55 = vector.load %arg6[%c0_48, %c0_49, %c0_50] : memref<2x8x32xf32, #tpu.memory_space<vmem>>, vector<1x8x32xf32>
    %56 = vector.shape_cast %55 : vector<1x8x32xf32> to vector<8x32xf32>
    %c1_51 = arith.constant 1 : index
    %c0_52 = arith.constant 0 : index
    %c0_53 = arith.constant 0 : index
    %57 = vector.load %arg6[%c1_51, %c0_52, %c0_53] : memref<2x8x32xf32, #tpu.memory_space<vmem>>, vector<1x8x32xf32>
    %58 = vector.shape_cast %57 : vector<1x8x32xf32> to vector<8x32xf32>
    %c0_54 = arith.constant 0 : index
    %c0_55 = arith.constant 0 : index
    %c0_56 = arith.constant 0 : index
    %59 = vector.load %arg7[%c0_54, %c0_55, %c0_56] : memref<2x8x32xf32, #tpu.memory_space<vmem>>, vector<1x8x32xf32>
    %60 = vector.shape_cast %59 : vector<1x8x32xf32> to vector<8x32xf32>
    %c1_57 = arith.constant 1 : index
    %c0_58 = arith.constant 0 : index
    %c0_59 = arith.constant 0 : index
    %61 = vector.load %arg7[%c1_57, %c0_58, %c0_59] : memref<2x8x32xf32, #tpu.memory_space<vmem>>, vector<1x8x32xf32>
    %62 = vector.shape_cast %61 : vector<1x8x32xf32> to vector<8x32xf32>
    %63 = arith.truncf %56 : vector<8x32xf32> to vector<8x32xbf16>
    %64 = arith.truncf %58 : vector<8x32xf32> to vector<8x32xbf16>
    %c0_60 = arith.constant 0 : index
    %c0_61 = arith.constant 0 : index
    %65 = vector.load %arg19[%c0_60, %c0_61] : memref<64x128xf32, #tpu.memory_space<vmem>>, vector<8x128xf32>
    %cst_62 = arith.constant dense<0.000000e+00> : vector<8x128xf32>
    %66 = tpu.matmul %63, %50, %cst_62 {dimension_numbers = #tpu.dot_dimension_numbers<[1], [0], [0], [1], [0, 0, 1, 1], [], []>} : vector<8x32xbf16>, vector<32x128xbf16>, vector<8x128xf32> -> vector<8x128xf32>
    %67 = arith.addf %65, %66 : vector<8x128xf32>
    %68 = vector.extract_strided_slice %67 {offsets = [0, 0], sizes = [8, 96], strides = [1, 1]} : vector<8x128xf32> to vector<8x96xf32>
    %69 = arith.negf %68 : vector<8x96xf32>
    %70 = math.exp %69 : vector<8x96xf32>
    %cst_63 = arith.constant 1.000000e+00 : f32
    %71 = vector.broadcast %cst_63 : f32 to vector<8x96xf32>
    %72 = arith.addf %71, %70 : vector<8x96xf32>
    %73 = arith.divf %71, %72 : vector<8x96xf32>
    %74 = vector.extract_strided_slice %67 {offsets = [0, 96], sizes = [8, 32], strides = [1, 1]} : vector<8x128xf32> to vector<8x32xf32>
    %75 = math.tanh %74 : vector<8x32xf32>
    %76 = vector.extract_strided_slice %73 {offsets = [0, 32], sizes = [8, 32], strides = [1, 1]} : vector<8x96xf32> to vector<8x32xf32>
    %77 = arith.mulf %76, %60 : vector<8x32xf32>
    %78 = vector.extract_strided_slice %73 {offsets = [0, 0], sizes = [8, 32], strides = [1, 1]} : vector<8x96xf32> to vector<8x32xf32>
    %79 = arith.mulf %78, %75 : vector<8x32xf32>
    %80 = arith.addf %77, %79 : vector<8x32xf32>
    %81 = vector.extract_strided_slice %73 {offsets = [0, 64], sizes = [8, 32], strides = [1, 1]} : vector<8x96xf32> to vector<8x32xf32>
    %82 = math.tanh %80 : vector<8x32xf32>
    %83 = arith.mulf %81, %82 : vector<8x32xf32>
    %84 = arith.truncf %83 : vector<8x32xf32> to vector<8x32xbf16>
    %85 = tpu.concatenate %84, %64 in 1 : vector<8x32xbf16>, vector<8x32xbf16> -> vector<8x64xbf16>
    %cst_64 = arith.constant dense<0.000000e+00> : vector<8x128xf32>
    %86 = tpu.matmul %85, %52, %cst_64 {dimension_numbers = #tpu.dot_dimension_numbers<[1], [0], [0], [1], [0, 0, 1, 1], [], []>} : vector<8x64xbf16>, vector<64x128xbf16>, vector<8x128xf32> -> vector<8x128xf32>
    %87 = vector.broadcast %54 : vector<1x128xf32> to vector<8x128xf32>
    %88 = arith.addf %86, %87 : vector<8x128xf32>
    %89 = vector.extract_strided_slice %88 {offsets = [0, 0], sizes = [8, 96], strides = [1, 1]} : vector<8x128xf32> to vector<8x96xf32>
    %90 = arith.negf %89 : vector<8x96xf32>
    %91 = math.exp %90 : vector<8x96xf32>
    %cst_65 = arith.constant 1.000000e+00 : f32
    %92 = vector.broadcast %cst_65 : f32 to vector<8x96xf32>
    %93 = arith.addf %92, %91 : vector<8x96xf32>
    %94 = arith.divf %92, %93 : vector<8x96xf32>
    %95 = vector.extract_strided_slice %88 {offsets = [0, 96], sizes = [8, 32], strides = [1, 1]} : vector<8x128xf32> to vector<8x32xf32>
    %96 = math.tanh %95 : vector<8x32xf32>
    %97 = vector.extract_strided_slice %94 {offsets = [0, 32], sizes = [8, 32], strides = [1, 1]} : vector<8x96xf32> to vector<8x32xf32>
    %98 = arith.mulf %97, %62 : vector<8x32xf32>
    %99 = vector.extract_strided_slice %94 {offsets = [0, 0], sizes = [8, 32], strides = [1, 1]} : vector<8x96xf32> to vector<8x32xf32>
    %100 = arith.mulf %99, %96 : vector<8x32xf32>
    %101 = arith.addf %98, %100 : vector<8x32xf32>
    %102 = vector.extract_strided_slice %94 {offsets = [0, 64], sizes = [8, 32], strides = [1, 1]} : vector<8x96xf32> to vector<8x32xf32>
    %103 = math.tanh %101 : vector<8x32xf32>
    %104 = arith.mulf %102, %103 : vector<8x32xf32>
    %105 = arith.truncf %104 : vector<8x32xf32> to vector<8x32xbf16>
    %c0_66 = arith.constant 0 : index
    %c0_67 = arith.constant 0 : index
    %106 = vector.load %arg20[%c0_66, %c0_67] : memref<8x256xf32, #tpu.memory_space<vmem>>, vector<8x32xf32>
    tpu.vector_store %arg20[%c0_66, %c0_67], %104 {strides = array<i32>} : memref<8x256xf32, #tpu.memory_space<vmem>>, vector<8x32xf32>,
    %c8 = arith.constant 8 : index
    %c0_68 = arith.constant 0 : index
    %107 = vector.load %arg19[%c8, %c0_68] : memref<64x128xf32, #tpu.memory_space<vmem>>, vector<8x128xf32>
    %cst_69 = arith.constant dense<0.000000e+00> : vector<8x128xf32>
    %108 = tpu.matmul %84, %50, %cst_69 {dimension_numbers = #tpu.dot_dimension_numbers<[1], [0], [0], [1], [0, 0, 1, 1], [], []>} : vector<8x32xbf16>, vector<32x128xbf16>, vector<8x128xf32> -> vector<8x128xf32>
    %109 = arith.addf %107, %108 : vector<8x128xf32>
    %110 = vector.extract_strided_slice %109 {offsets = [0, 0], sizes = [8, 96], strides = [1, 1]} : vector<8x128xf32> to vector<8x96xf32>
    %111 = arith.negf %110 : vector<8x96xf32>
    %112 = math.exp %111 : vector<8x96xf32>
    %cst_70 = arith.constant 1.000000e+00 : f32
    %113 = vector.broadcast %cst_70 : f32 to vector<8x96xf32>
    %114 = arith.addf %113, %112 : vector<8x96xf32>
    %115 = arith.divf %113, %114 : vector<8x96xf32>
    %116 = vector.extract_strided_slice %109 {offsets = [0, 96], sizes = [8, 32], strides = [1, 1]} : vector<8x128xf32> to vector<8x32xf32>
    %117 = math.tanh %116 : vector<8x32xf32>
    %118 = vector.extract_strided_slice %115 {offsets = [0, 32], sizes = [8, 32], strides = [1, 1]} : vector<8x96xf32> to vector<8x32xf32>
    %119 = arith.mulf %118, %80 : vector<8x32xf32>
    %120 = vector.extract_strided_slice %115 {offsets = [0, 0], sizes = [8, 32], strides = [1, 1]} : vector<8x96xf32> to vector<8x32xf32>
    %121 = arith.mulf %120, %117 : vector<8x32xf32>
    %122 = arith.addf %119, %121 : vector<8x32xf32>
    %123 = vector.extract_strided_slice %115 {offsets = [0, 64], sizes = [8, 32], strides = [1, 1]} : vector<8x96xf32> to vector<8x32xf32>
    %124 = math.tanh %122 : vector<8x32xf32>
    %125 = arith.mulf %123, %124 : vector<8x32xf32>
    %126 = arith.truncf %125 : vector<8x32xf32> to vector<8x32xbf16>
    %127 = tpu.concatenate %126, %105 in 1 : vector<8x32xbf16>, vector<8x32xbf16> -> vector<8x64xbf16>
    %cst_71 = arith.constant dense<0.000000e+00> : vector<8x128xf32>
    %128 = tpu.matmul %127, %52, %cst_71 {dimension_numbers = #tpu.dot_dimension_numbers<[1], [0], [0], [1], [0, 0, 1, 1], [], []>} : vector<8x64xbf16>, vector<64x128xbf16>, vector<8x128xf32> -> vector<8x128xf32>
    %129 = vector.broadcast %54 : vector<1x128xf32> to vector<8x128xf32>
    %130 = arith.addf %128, %129 : vector<8x128xf32>
    %131 = vector.extract_strided_slice %130 {offsets = [0, 0], sizes = [8, 96], strides = [1, 1]} : vector<8x128xf32> to vector<8x96xf32>
    %132 = arith.negf %131 : vector<8x96xf32>
    %133 = math.exp %132 : vector<8x96xf32>
    %cst_72 = arith.constant 1.000000e+00 : f32
    %134 = vector.broadcast %cst_72 : f32 to vector<8x96xf32>
    %135 = arith.addf %134, %133 : vector<8x96xf32>
    %136 = arith.divf %134, %135 : vector<8x96xf32>
    %137 = vector.extract_strided_slice %130 {offsets = [0, 96], sizes = [8, 32], strides = [1, 1]} : vector<8x128xf32> to vector<8x32xf32>
    %138 = math.tanh %137 : vector<8x32xf32>
    %139 = vector.extract_strided_slice %136 {offsets = [0, 32], sizes = [8, 32], strides = [1, 1]} : vector<8x96xf32> to vector<8x32xf32>
    %140 = arith.mulf %139, %101 : vector<8x32xf32>
    %141 = vector.extract_strided_slice %136 {offsets = [0, 0], sizes = [8, 32], strides = [1, 1]} : vector<8x96xf32> to vector<8x32xf32>
    %142 = arith.mulf %141, %138 : vector<8x32xf32>
    %143 = arith.addf %140, %142 : vector<8x32xf32>
    %144 = vector.extract_strided_slice %136 {offsets = [0, 64], sizes = [8, 32], strides = [1, 1]} : vector<8x96xf32> to vector<8x32xf32>
    %145 = math.tanh %143 : vector<8x32xf32>
    %146 = arith.mulf %144, %145 : vector<8x32xf32>
    %147 = arith.truncf %146 : vector<8x32xf32> to vector<8x32xbf16>
    %c0_73 = arith.constant 0 : index
    %c32 = arith.constant 32 : index
    %148 = vector.load %arg20[%c0_73, %c32] : memref<8x256xf32, #tpu.memory_space<vmem>>, vector<8x32xf32>
    tpu.vector_store %arg20[%c0_73, %c32], %146 {strides = array<i32>} : memref<8x256xf32, #tpu.memory_space<vmem>>, vector<8x32xf32>,
    %c16 = arith.constant 16 : index
    %c0_74 = arith.constant 0 : index
    %149 = vector.load %arg19[%c16, %c0_74] : memref<64x128xf32, #tpu.memory_space<vmem>>, vector<8x128xf32>
    %cst_75 = arith.constant dense<0.000000e+00> : vector<8x128xf32>
    %150 = tpu.matmul %126, %50, %cst_75 {dimension_numbers = #tpu.dot_dimension_numbers<[1], [0], [0], [1], [0, 0, 1, 1], [], []>} : vector<8x32xbf16>, vector<32x128xbf16>, vector<8x128xf32> -> vector<8x128xf32>
    %151 = arith.addf %149, %150 : vector<8x128xf32>
    %152 = vector.extract_strided_slice %151 {offsets = [0, 0], sizes = [8, 96], strides = [1, 1]} : vector<8x128xf32> to vector<8x96xf32>
    %153 = arith.negf %152 : vector<8x96xf32>
    %154 = math.exp %153 : vector<8x96xf32>
    %cst_76 = arith.constant 1.000000e+00 : f32
    %155 = vector.broadcast %cst_76 : f32 to vector<8x96xf32>
    %156 = arith.addf %155, %154 : vector<8x96xf32>
    %157 = arith.divf %155, %156 : vector<8x96xf32>
    %158 = vector.extract_strided_slice %151 {offsets = [0, 96], sizes = [8, 32], strides = [1, 1]} : vector<8x128xf32> to vector<8x32xf32>
    %159 = math.tanh %158 : vector<8x32xf32>
    %160 = vector.extract_strided_slice %157 {offsets = [0, 32], sizes = [8, 32], strides = [1, 1]} : vector<8x96xf32> to vector<8x32xf32>
    %161 = arith.mulf %160, %122 : vector<8x32xf32>
    %162 = vector.extract_strided_slice %157 {offsets = [0, 0], sizes = [8, 32], strides = [1, 1]} : vector<8x96xf32> to vector<8x32xf32>
    %163 = arith.mulf %162, %159 : vector<8x32xf32>
    %164 = arith.addf %161, %163 : vector<8x32xf32>
    %165 = vector.extract_strided_slice %157 {offsets = [0, 64], sizes = [8, 32], strides = [1, 1]} : vector<8x96xf32> to vector<8x32xf32>
    %166 = math.tanh %164 : vector<8x32xf32>
    %167 = arith.mulf %165, %166 : vector<8x32xf32>
    %168 = arith.truncf %167 : vector<8x32xf32> to vector<8x32xbf16>
    %169 = tpu.concatenate %168, %147 in 1 : vector<8x32xbf16>, vector<8x32xbf16> -> vector<8x64xbf16>
    %cst_77 = arith.constant dense<0.000000e+00> : vector<8x128xf32>
    %170 = tpu.matmul %169, %52, %cst_77 {dimension_numbers = #tpu.dot_dimension_numbers<[1], [0], [0], [1], [0, 0, 1, 1], [], []>} : vector<8x64xbf16>, vector<64x128xbf16>, vector<8x128xf32> -> vector<8x128xf32>
    %171 = vector.broadcast %54 : vector<1x128xf32> to vector<8x128xf32>
    %172 = arith.addf %170, %171 : vector<8x128xf32>
    %173 = vector.extract_strided_slice %172 {offsets = [0, 0], sizes = [8, 96], strides = [1, 1]} : vector<8x128xf32> to vector<8x96xf32>
    %174 = arith.negf %173 : vector<8x96xf32>
    %175 = math.exp %174 : vector<8x96xf32>
    %cst_78 = arith.constant 1.000000e+00 : f32
    %176 = vector.broadcast %cst_78 : f32 to vector<8x96xf32>
    %177 = arith.addf %176, %175 : vector<8x96xf32>
    %178 = arith.divf %176, %177 : vector<8x96xf32>
    %179 = vector.extract_strided_slice %172 {offsets = [0, 96], sizes = [8, 32], strides = [1, 1]} : vector<8x128xf32> to vector<8x32xf32>
    %180 = math.tanh %179 : vector<8x32xf32>
    %181 = vector.extract_strided_slice %178 {offsets = [0, 32], sizes = [8, 32], strides = [1, 1]} : vector<8x96xf32> to vector<8x32xf32>
    %182 = arith.mulf %181, %143 : vector<8x32xf32>
    %183 = vector.extract_strided_slice %178 {offsets = [0, 0], sizes = [8, 32], strides = [1, 1]} : vector<8x96xf32> to vector<8x32xf32>
    %184 = arith.mulf %183, %180 : vector<8x32xf32>
    %185 = arith.addf %182, %184 : vector<8x32xf32>
    %186 = vector.extract_strided_slice %178 {offsets = [0, 64], sizes = [8, 32], strides = [1, 1]} : vector<8x96xf32> to vector<8x32xf32>
    %187 = math.tanh %185 : vector<8x32xf32>
    %188 = arith.mulf %186, %187 : vector<8x32xf32>
    %189 = arith.truncf %188 : vector<8x32xf32> to vector<8x32xbf16>
    %c0_79 = arith.constant 0 : index
    %c64 = arith.constant 64 : index
    %190 = vector.load %arg20[%c0_79, %c64] : memref<8x256xf32, #tpu.memory_space<vmem>>, vector<8x32xf32>
    tpu.vector_store %arg20[%c0_79, %c64], %188 {strides = array<i32>} : memref<8x256xf32, #tpu.memory_space<vmem>>, vector<8x32xf32>,
    %c24 = arith.constant 24 : index
    %c0_80 = arith.constant 0 : index
    %191 = vector.load %arg19[%c24, %c0_80] : memref<64x128xf32, #tpu.memory_space<vmem>>, vector<8x128xf32>
    %cst_81 = arith.constant dense<0.000000e+00> : vector<8x128xf32>
    %192 = tpu.matmul %168, %50, %cst_81 {dimension_numbers = #tpu.dot_dimension_numbers<[1], [0], [0], [1], [0, 0, 1, 1], [], []>} : vector<8x32xbf16>, vector<32x128xbf16>, vector<8x128xf32> -> vector<8x128xf32>
    %193 = arith.addf %191, %192 : vector<8x128xf32>
    %194 = vector.extract_strided_slice %193 {offsets = [0, 0], sizes = [8, 96], strides = [1, 1]} : vector<8x128xf32> to vector<8x96xf32>
    %195 = arith.negf %194 : vector<8x96xf32>
    %196 = math.exp %195 : vector<8x96xf32>
    %cst_82 = arith.constant 1.000000e+00 : f32
    %197 = vector.broadcast %cst_82 : f32 to vector<8x96xf32>
    %198 = arith.addf %197, %196 : vector<8x96xf32>
    %199 = arith.divf %197, %198 : vector<8x96xf32>
    %200 = vector.extract_strided_slice %193 {offsets = [0, 96], sizes = [8, 32], strides = [1, 1]} : vector<8x128xf32> to vector<8x32xf32>
    %201 = math.tanh %200 : vector<8x32xf32>
    %202 = vector.extract_strided_slice %199 {offsets = [0, 32], sizes = [8, 32], strides = [1, 1]} : vector<8x96xf32> to vector<8x32xf32>
    %203 = arith.mulf %202, %164 : vector<8x32xf32>
    %204 = vector.extract_strided_slice %199 {offsets = [0, 0], sizes = [8, 32], strides = [1, 1]} : vector<8x96xf32> to vector<8x32xf32>
    %205 = arith.mulf %204, %201 : vector<8x32xf32>
    %206 = arith.addf %203, %205 : vector<8x32xf32>
    %207 = vector.extract_strided_slice %199 {offsets = [0, 64], sizes = [8, 32], strides = [1, 1]} : vector<8x96xf32> to vector<8x32xf32>
    %208 = math.tanh %206 : vector<8x32xf32>
    %209 = arith.mulf %207, %208 : vector<8x32xf32>
    %210 = arith.truncf %209 : vector<8x32xf32> to vector<8x32xbf16>
    %211 = tpu.concatenate %210, %189 in 1 : vector<8x32xbf16>, vector<8x32xbf16> -> vector<8x64xbf16>
    %cst_83 = arith.constant dense<0.000000e+00> : vector<8x128xf32>
    %212 = tpu.matmul %211, %52, %cst_83 {dimension_numbers = #tpu.dot_dimension_numbers<[1], [0], [0], [1], [0, 0, 1, 1], [], []>} : vector<8x64xbf16>, vector<64x128xbf16>, vector<8x128xf32> -> vector<8x128xf32>
    %213 = vector.broadcast %54 : vector<1x128xf32> to vector<8x128xf32>
    %214 = arith.addf %212, %213 : vector<8x128xf32>
    %215 = vector.extract_strided_slice %214 {offsets = [0, 0], sizes = [8, 96], strides = [1, 1]} : vector<8x128xf32> to vector<8x96xf32>
    %216 = arith.negf %215 : vector<8x96xf32>
    %217 = math.exp %216 : vector<8x96xf32>
    %cst_84 = arith.constant 1.000000e+00 : f32
    %218 = vector.broadcast %cst_84 : f32 to vector<8x96xf32>
    %219 = arith.addf %218, %217 : vector<8x96xf32>
    %220 = arith.divf %218, %219 : vector<8x96xf32>
    %221 = vector.extract_strided_slice %214 {offsets = [0, 96], sizes = [8, 32], strides = [1, 1]} : vector<8x128xf32> to vector<8x32xf32>
    %222 = math.tanh %221 : vector<8x32xf32>
    %223 = vector.extract_strided_slice %220 {offsets = [0, 32], sizes = [8, 32], strides = [1, 1]} : vector<8x96xf32> to vector<8x32xf32>
    %224 = arith.mulf %223, %185 : vector<8x32xf32>
    %225 = vector.extract_strided_slice %220 {offsets = [0, 0], sizes = [8, 32], strides = [1, 1]} : vector<8x96xf32> to vector<8x32xf32>
    %226 = arith.mulf %225, %222 : vector<8x32xf32>
    %227 = arith.addf %224, %226 : vector<8x32xf32>
    %228 = vector.extract_strided_slice %220 {offsets = [0, 64], sizes = [8, 32], strides = [1, 1]} : vector<8x96xf32> to vector<8x32xf32>
    %229 = math.tanh %227 : vector<8x32xf32>
    %230 = arith.mulf %228, %229 : vector<8x32xf32>
    %231 = arith.truncf %230 : vector<8x32xf32> to vector<8x32xbf16>
    %c0_85 = arith.constant 0 : index
    %c96 = arith.constant 96 : index
    %232 = vector.load %arg20[%c0_85, %c96] : memref<8x256xf32, #tpu.memory_space<vmem>>, vector<8x32xf32>
    tpu.vector_store %arg20[%c0_85, %c96], %230 {strides = array<i32>} : memref<8x256xf32, #tpu.memory_space<vmem>>, vector<8x32xf32>,
    %c32_86 = arith.constant 32 : index
    %c0_87 = arith.constant 0 : index
    %233 = vector.load %arg19[%c32_86, %c0_87] : memref<64x128xf32, #tpu.memory_space<vmem>>, vector<8x128xf32>
    %cst_88 = arith.constant dense<0.000000e+00> : vector<8x128xf32>
    %234 = tpu.matmul %210, %50, %cst_88 {dimension_numbers = #tpu.dot_dimension_numbers<[1], [0], [0], [1], [0, 0, 1, 1], [], []>} : vector<8x32xbf16>, vector<32x128xbf16>, vector<8x128xf32> -> vector<8x128xf32>
    %235 = arith.addf %233, %234 : vector<8x128xf32>
    %236 = vector.extract_strided_slice %235 {offsets = [0, 0], sizes = [8, 96], strides = [1, 1]} : vector<8x128xf32> to vector<8x96xf32>
    %237 = arith.negf %236 : vector<8x96xf32>
    %238 = math.exp %237 : vector<8x96xf32>
    %cst_89 = arith.constant 1.000000e+00 : f32
    %239 = vector.broadcast %cst_89 : f32 to vector<8x96xf32>
    %240 = arith.addf %239, %238 : vector<8x96xf32>
    %241 = arith.divf %239, %240 : vector<8x96xf32>
    %242 = vector.extract_strided_slice %235 {offsets = [0, 96], sizes = [8, 32], strides = [1, 1]} : vector<8x128xf32> to vector<8x32xf32>
    %243 = math.tanh %242 : vector<8x32xf32>
    %244 = vector.extract_strided_slice %241 {offsets = [0, 32], sizes = [8, 32], strides = [1, 1]} : vector<8x96xf32> to vector<8x32xf32>
    %245 = arith.mulf %244, %206 : vector<8x32xf32>
    %246 = vector.extract_strided_slice %241 {offsets = [0, 0], sizes = [8, 32], strides = [1, 1]} : vector<8x96xf32> to vector<8x32xf32>
    %247 = arith.mulf %246, %243 : vector<8x32xf32>
    %248 = arith.addf %245, %247 : vector<8x32xf32>
    %249 = vector.extract_strided_slice %241 {offsets = [0, 64], sizes = [8, 32], strides = [1, 1]} : vector<8x96xf32> to vector<8x32xf32>
    %250 = math.tanh %248 : vector<8x32xf32>
    %251 = arith.mulf %249, %250 : vector<8x32xf32>
    %252 = arith.truncf %251 : vector<8x32xf32> to vector<8x32xbf16>
    %253 = tpu.concatenate %252, %231 in 1 : vector<8x32xbf16>, vector<8x32xbf16> -> vector<8x64xbf16>
    %cst_90 = arith.constant dense<0.000000e+00> : vector<8x128xf32>
    %254 = tpu.matmul %253, %52, %cst_90 {dimension_numbers = #tpu.dot_dimension_numbers<[1], [0], [0], [1], [0, 0, 1, 1], [], []>} : vector<8x64xbf16>, vector<64x128xbf16>, vector<8x128xf32> -> vector<8x128xf32>
    %255 = vector.broadcast %54 : vector<1x128xf32> to vector<8x128xf32>
    %256 = arith.addf %254, %255 : vector<8x128xf32>
    %257 = vector.extract_strided_slice %256 {offsets = [0, 0], sizes = [8, 96], strides = [1, 1]} : vector<8x128xf32> to vector<8x96xf32>
    %258 = arith.negf %257 : vector<8x96xf32>
    %259 = math.exp %258 : vector<8x96xf32>
    %cst_91 = arith.constant 1.000000e+00 : f32
    %260 = vector.broadcast %cst_91 : f32 to vector<8x96xf32>
    %261 = arith.addf %260, %259 : vector<8x96xf32>
    %262 = arith.divf %260, %261 : vector<8x96xf32>
    %263 = vector.extract_strided_slice %256 {offsets = [0, 96], sizes = [8, 32], strides = [1, 1]} : vector<8x128xf32> to vector<8x32xf32>
    %264 = math.tanh %263 : vector<8x32xf32>
    %265 = vector.extract_strided_slice %262 {offsets = [0, 32], sizes = [8, 32], strides = [1, 1]} : vector<8x96xf32> to vector<8x32xf32>
    %266 = arith.mulf %265, %227 : vector<8x32xf32>
    %267 = vector.extract_strided_slice %262 {offsets = [0, 0], sizes = [8, 32], strides = [1, 1]} : vector<8x96xf32> to vector<8x32xf32>
    %268 = arith.mulf %267, %264 : vector<8x32xf32>
    %269 = arith.addf %266, %268 : vector<8x32xf32>
    %270 = vector.extract_strided_slice %262 {offsets = [0, 64], sizes = [8, 32], strides = [1, 1]} : vector<8x96xf32> to vector<8x32xf32>
    %271 = math.tanh %269 : vector<8x32xf32>
    %272 = arith.mulf %270, %271 : vector<8x32xf32>
    %273 = arith.truncf %272 : vector<8x32xf32> to vector<8x32xbf16>
    %c0_92 = arith.constant 0 : index
    %c128 = arith.constant 128 : index
    %274 = vector.load %arg20[%c0_92, %c128] : memref<8x256xf32, #tpu.memory_space<vmem>>, vector<8x32xf32>
    tpu.vector_store %arg20[%c0_92, %c128], %272 {strides = array<i32>} : memref<8x256xf32, #tpu.memory_space<vmem>>, vector<8x32xf32>,
    %c40 = arith.constant 40 : index
    %c0_93 = arith.constant 0 : index
    %275 = vector.load %arg19[%c40, %c0_93] : memref<64x128xf32, #tpu.memory_space<vmem>>, vector<8x128xf32>
    %cst_94 = arith.constant dense<0.000000e+00> : vector<8x128xf32>
    %276 = tpu.matmul %252, %50, %cst_94 {dimension_numbers = #tpu.dot_dimension_numbers<[1], [0], [0], [1], [0, 0, 1, 1], [], []>} : vector<8x32xbf16>, vector<32x128xbf16>, vector<8x128xf32> -> vector<8x128xf32>
    %277 = arith.addf %275, %276 : vector<8x128xf32>
    %278 = vector.extract_strided_slice %277 {offsets = [0, 0], sizes = [8, 96], strides = [1, 1]} : vector<8x128xf32> to vector<8x96xf32>
    %279 = arith.negf %278 : vector<8x96xf32>
    %280 = math.exp %279 : vector<8x96xf32>
    %cst_95 = arith.constant 1.000000e+00 : f32
    %281 = vector.broadcast %cst_95 : f32 to vector<8x96xf32>
    %282 = arith.addf %281, %280 : vector<8x96xf32>
    %283 = arith.divf %281, %282 : vector<8x96xf32>
    %284 = vector.extract_strided_slice %277 {offsets = [0, 96], sizes = [8, 32], strides = [1, 1]} : vector<8x128xf32> to vector<8x32xf32>
    %285 = math.tanh %284 : vector<8x32xf32>
    %286 = vector.extract_strided_slice %283 {offsets = [0, 32], sizes = [8, 32], strides = [1, 1]} : vector<8x96xf32> to vector<8x32xf32>
    %287 = arith.mulf %286, %248 : vector<8x32xf32>
    %288 = vector.extract_strided_slice %283 {offsets = [0, 0], sizes = [8, 32], strides = [1, 1]} : vector<8x96xf32> to vector<8x32xf32>
    %289 = arith.mulf %288, %285 : vector<8x32xf32>
    %290 = arith.addf %287, %289 : vector<8x32xf32>
    %291 = vector.extract_strided_slice %283 {offsets = [0, 64], sizes = [8, 32], strides = [1, 1]} : vector<8x96xf32> to vector<8x32xf32>
    %292 = math.tanh %290 : vector<8x32xf32>
    %293 = arith.mulf %291, %292 : vector<8x32xf32>
    %294 = arith.truncf %293 : vector<8x32xf32> to vector<8x32xbf16>
    %295 = tpu.concatenate %294, %273 in 1 : vector<8x32xbf16>, vector<8x32xbf16> -> vector<8x64xbf16>
    %cst_96 = arith.constant dense<0.000000e+00> : vector<8x128xf32>
    %296 = tpu.matmul %295, %52, %cst_96 {dimension_numbers = #tpu.dot_dimension_numbers<[1], [0], [0], [1], [0, 0, 1, 1], [], []>} : vector<8x64xbf16>, vector<64x128xbf16>, vector<8x128xf32> -> vector<8x128xf32>
    %297 = vector.broadcast %54 : vector<1x128xf32> to vector<8x128xf32>
    %298 = arith.addf %296, %297 : vector<8x128xf32>
    %299 = vector.extract_strided_slice %298 {offsets = [0, 0], sizes = [8, 96], strides = [1, 1]} : vector<8x128xf32> to vector<8x96xf32>
    %300 = arith.negf %299 : vector<8x96xf32>
    %301 = math.exp %300 : vector<8x96xf32>
    %cst_97 = arith.constant 1.000000e+00 : f32
    %302 = vector.broadcast %cst_97 : f32 to vector<8x96xf32>
    %303 = arith.addf %302, %301 : vector<8x96xf32>
    %304 = arith.divf %302, %303 : vector<8x96xf32>
    %305 = vector.extract_strided_slice %298 {offsets = [0, 96], sizes = [8, 32], strides = [1, 1]} : vector<8x128xf32> to vector<8x32xf32>
    %306 = math.tanh %305 : vector<8x32xf32>
    %307 = vector.extract_strided_slice %304 {offsets = [0, 32], sizes = [8, 32], strides = [1, 1]} : vector<8x96xf32> to vector<8x32xf32>
    %308 = arith.mulf %307, %269 : vector<8x32xf32>
    %309 = vector.extract_strided_slice %304 {offsets = [0, 0], sizes = [8, 32], strides = [1, 1]} : vector<8x96xf32> to vector<8x32xf32>
    %310 = arith.mulf %309, %306 : vector<8x32xf32>
    %311 = arith.addf %308, %310 : vector<8x32xf32>
    %312 = vector.extract_strided_slice %304 {offsets = [0, 64], sizes = [8, 32], strides = [1, 1]} : vector<8x96xf32> to vector<8x32xf32>
    %313 = math.tanh %311 : vector<8x32xf32>
    %314 = arith.mulf %312, %313 : vector<8x32xf32>
    %315 = arith.truncf %314 : vector<8x32xf32> to vector<8x32xbf16>
    %c0_98 = arith.constant 0 : index
    %c160 = arith.constant 160 : index
    %316 = vector.load %arg20[%c0_98, %c160] : memref<8x256xf32, #tpu.memory_space<vmem>>, vector<8x32xf32>
    tpu.vector_store %arg20[%c0_98, %c160], %314 {strides = array<i32>} : memref<8x256xf32, #tpu.memory_space<vmem>>, vector<8x32xf32>,
    %c48 = arith.constant 48 : index
    %c0_99 = arith.constant 0 : index
    %317 = vector.load %arg19[%c48, %c0_99] : memref<64x128xf32, #tpu.memory_space<vmem>>, vector<8x128xf32>
    %cst_100 = arith.constant dense<0.000000e+00> : vector<8x128xf32>
    %318 = tpu.matmul %294, %50, %cst_100 {dimension_numbers = #tpu.dot_dimension_numbers<[1], [0], [0], [1], [0, 0, 1, 1], [], []>} : vector<8x32xbf16>, vector<32x128xbf16>, vector<8x128xf32> -> vector<8x128xf32>
    %319 = arith.addf %317, %318 : vector<8x128xf32>
    %320 = vector.extract_strided_slice %319 {offsets = [0, 0], sizes = [8, 96], strides = [1, 1]} : vector<8x128xf32> to vector<8x96xf32>
    %321 = arith.negf %320 : vector<8x96xf32>
    %322 = math.exp %321 : vector<8x96xf32>
    %cst_101 = arith.constant 1.000000e+00 : f32
    %323 = vector.broadcast %cst_101 : f32 to vector<8x96xf32>
    %324 = arith.addf %323, %322 : vector<8x96xf32>
    %325 = arith.divf %323, %324 : vector<8x96xf32>
    %326 = vector.extract_strided_slice %319 {offsets = [0, 96], sizes = [8, 32], strides = [1, 1]} : vector<8x128xf32> to vector<8x32xf32>
    %327 = math.tanh %326 : vector<8x32xf32>
    %328 = vector.extract_strided_slice %325 {offsets = [0, 32], sizes = [8, 32], strides = [1, 1]} : vector<8x96xf32> to vector<8x32xf32>
    %329 = arith.mulf %328, %290 : vector<8x32xf32>
    %330 = vector.extract_strided_slice %325 {offsets = [0, 0], sizes = [8, 32], strides = [1, 1]} : vector<8x96xf32> to vector<8x32xf32>
    %331 = arith.mulf %330, %327 : vector<8x32xf32>
    %332 = arith.addf %329, %331 : vector<8x32xf32>
    %333 = vector.extract_strided_slice %325 {offsets = [0, 64], sizes = [8, 32], strides = [1, 1]} : vector<8x96xf32> to vector<8x32xf32>
    %334 = math.tanh %332 : vector<8x32xf32>
    %335 = arith.mulf %333, %334 : vector<8x32xf32>
    %336 = arith.truncf %335 : vector<8x32xf32> to vector<8x32xbf16>
    %337 = tpu.concatenate %336, %315 in 1 : vector<8x32xbf16>, vector<8x32xbf16> -> vector<8x64xbf16>
    %cst_102 = arith.constant dense<0.000000e+00> : vector<8x128xf32>
    %338 = tpu.matmul %337, %52, %cst_102 {dimension_numbers = #tpu.dot_dimension_numbers<[1], [0], [0], [1], [0, 0, 1, 1], [], []>} : vector<8x64xbf16>, vector<64x128xbf16>, vector<8x128xf32> -> vector<8x128xf32>
    %339 = vector.broadcast %54 : vector<1x128xf32> to vector<8x128xf32>
    %340 = arith.addf %338, %339 : vector<8x128xf32>
    %341 = vector.extract_strided_slice %340 {offsets = [0, 0], sizes = [8, 96], strides = [1, 1]} : vector<8x128xf32> to vector<8x96xf32>
    %342 = arith.negf %341 : vector<8x96xf32>
    %343 = math.exp %342 : vector<8x96xf32>
    %cst_103 = arith.constant 1.000000e+00 : f32
    %344 = vector.broadcast %cst_103 : f32 to vector<8x96xf32>
    %345 = arith.addf %344, %343 : vector<8x96xf32>
    %346 = arith.divf %344, %345 : vector<8x96xf32>
    %347 = vector.extract_strided_slice %340 {offsets = [0, 96], sizes = [8, 32], strides = [1, 1]} : vector<8x128xf32> to vector<8x32xf32>
    %348 = math.tanh %347 : vector<8x32xf32>
    %349 = vector.extract_strided_slice %346 {offsets = [0, 32], sizes = [8, 32], strides = [1, 1]} : vector<8x96xf32> to vector<8x32xf32>
    %350 = arith.mulf %349, %311 : vector<8x32xf32>
    %351 = vector.extract_strided_slice %346 {offsets = [0, 0], sizes = [8, 32], strides = [1, 1]} : vector<8x96xf32> to vector<8x32xf32>
    %352 = arith.mulf %351, %348 : vector<8x32xf32>
    %353 = arith.addf %350, %352 : vector<8x32xf32>
    %354 = vector.extract_strided_slice %346 {offsets = [0, 64], sizes = [8, 32], strides = [1, 1]} : vector<8x96xf32> to vector<8x32xf32>
    %355 = math.tanh %353 : vector<8x32xf32>
    %356 = arith.mulf %354, %355 : vector<8x32xf32>
    %357 = arith.truncf %356 : vector<8x32xf32> to vector<8x32xbf16>
    %c0_104 = arith.constant 0 : index
    %c192 = arith.constant 192 : index
    %358 = vector.load %arg20[%c0_104, %c192] : memref<8x256xf32, #tpu.memory_space<vmem>>, vector<8x32xf32>
    tpu.vector_store %arg20[%c0_104, %c192], %356 {strides = array<i32>} : memref<8x256xf32, #tpu.memory_space<vmem>>, vector<8x32xf32>,
    %c56 = arith.constant 56 : index
    %c0_105 = arith.constant 0 : index
    %359 = vector.load %arg19[%c56, %c0_105] : memref<64x128xf32, #tpu.memory_space<vmem>>, vector<8x128xf32>
    %cst_106 = arith.constant dense<0.000000e+00> : vector<8x128xf32>
    %360 = tpu.matmul %336, %50, %cst_106 {dimension_numbers = #tpu.dot_dimension_numbers<[1], [0], [0], [1], [0, 0, 1, 1], [], []>} : vector<8x32xbf16>, vector<32x128xbf16>, vector<8x128xf32> -> vector<8x128xf32>
    %361 = arith.addf %359, %360 : vector<8x128xf32>
    %362 = vector.extract_strided_slice %361 {offsets = [0, 0], sizes = [8, 96], strides = [1, 1]} : vector<8x128xf32> to vector<8x96xf32>
    %363 = arith.negf %362 : vector<8x96xf32>
    %364 = math.exp %363 : vector<8x96xf32>
    %cst_107 = arith.constant 1.000000e+00 : f32
    %365 = vector.broadcast %cst_107 : f32 to vector<8x96xf32>
    %366 = arith.addf %365, %364 : vector<8x96xf32>
    %367 = arith.divf %365, %366 : vector<8x96xf32>
    %368 = vector.extract_strided_slice %361 {offsets = [0, 96], sizes = [8, 32], strides = [1, 1]} : vector<8x128xf32> to vector<8x32xf32>
    %369 = math.tanh %368 : vector<8x32xf32>
    %370 = vector.extract_strided_slice %367 {offsets = [0, 32], sizes = [8, 32], strides = [1, 1]} : vector<8x96xf32> to vector<8x32xf32>
    %371 = arith.mulf %370, %332 : vector<8x32xf32>
    %372 = vector.extract_strided_slice %367 {offsets = [0, 0], sizes = [8, 32], strides = [1, 1]} : vector<8x96xf32> to vector<8x32xf32>
    %373 = arith.mulf %372, %369 : vector<8x32xf32>
    %374 = arith.addf %371, %373 : vector<8x32xf32>
    %375 = vector.extract_strided_slice %367 {offsets = [0, 64], sizes = [8, 32], strides = [1, 1]} : vector<8x96xf32> to vector<8x32xf32>
    %376 = math.tanh %374 : vector<8x32xf32>
    %377 = arith.mulf %375, %376 : vector<8x32xf32>
    %378 = arith.truncf %377 : vector<8x32xf32> to vector<8x32xbf16>
    %379 = tpu.concatenate %378, %357 in 1 : vector<8x32xbf16>, vector<8x32xbf16> -> vector<8x64xbf16>
    %cst_108 = arith.constant dense<0.000000e+00> : vector<8x128xf32>
    %380 = tpu.matmul %379, %52, %cst_108 {dimension_numbers = #tpu.dot_dimension_numbers<[1], [0], [0], [1], [0, 0, 1, 1], [], []>} : vector<8x64xbf16>, vector<64x128xbf16>, vector<8x128xf32> -> vector<8x128xf32>
    %381 = vector.broadcast %54 : vector<1x128xf32> to vector<8x128xf32>
    %382 = arith.addf %380, %381 : vector<8x128xf32>
    %383 = vector.extract_strided_slice %382 {offsets = [0, 0], sizes = [8, 96], strides = [1, 1]} : vector<8x128xf32> to vector<8x96xf32>
    %384 = arith.negf %383 : vector<8x96xf32>
    %385 = math.exp %384 : vector<8x96xf32>
    %cst_109 = arith.constant 1.000000e+00 : f32
    %386 = vector.broadcast %cst_109 : f32 to vector<8x96xf32>
    %387 = arith.addf %386, %385 : vector<8x96xf32>
    %388 = arith.divf %386, %387 : vector<8x96xf32>
    %389 = vector.extract_strided_slice %382 {offsets = [0, 96], sizes = [8, 32], strides = [1, 1]} : vector<8x128xf32> to vector<8x32xf32>
    %390 = math.tanh %389 : vector<8x32xf32>
    %391 = vector.extract_strided_slice %388 {offsets = [0, 32], sizes = [8, 32], strides = [1, 1]} : vector<8x96xf32> to vector<8x32xf32>
    %392 = arith.mulf %391, %353 : vector<8x32xf32>
    %393 = vector.extract_strided_slice %388 {offsets = [0, 0], sizes = [8, 32], strides = [1, 1]} : vector<8x96xf32> to vector<8x32xf32>
    %394 = arith.mulf %393, %390 : vector<8x32xf32>
    %395 = arith.addf %392, %394 : vector<8x32xf32>
    %396 = vector.extract_strided_slice %388 {offsets = [0, 64], sizes = [8, 32], strides = [1, 1]} : vector<8x96xf32> to vector<8x32xf32>
    %397 = math.tanh %395 : vector<8x32xf32>
    %398 = arith.mulf %396, %397 : vector<8x32xf32>
    %c0_110 = arith.constant 0 : index
    %c224 = arith.constant 224 : index
    %399 = vector.load %arg20[%c0_110, %c224] : memref<8x256xf32, #tpu.memory_space<vmem>>, vector<8x32xf32>
    tpu.vector_store %arg20[%c0_110, %c224], %398 {strides = array<i32>} : memref<8x256xf32, #tpu.memory_space<vmem>>, vector<8x32xf32>,
    %c0_111 = arith.constant 0 : index
    %c0_112 = arith.constant 0 : index
    %400 = vector.load %arg20[%c0_111, %c0_112] : memref<8x256xf32, #tpu.memory_space<vmem>>, vector<8x256xf32>
    %401 = arith.truncf %400 : vector<8x256xf32> to vector<8x256xbf16>
    %c0_113 = arith.constant 0 : index
    %c0_114 = arith.constant 0 : index
    %402 = vector.load %arg13[%c0_113, %c0_114] : memref<256x4xbf16, #tpu.memory_space<vmem>>, vector<256x4xbf16>
    %cst_115 = arith.constant dense<0.000000e+00> : vector<8x4xf32>
    %403 = tpu.matmul %401, %402, %cst_115 {dimension_numbers = #tpu.dot_dimension_numbers<[1], [0], [0], [1], [0, 0, 1, 1], [], []>} : vector<8x256xbf16>, vector<256x4xbf16>, vector<8x4xf32> -> vector<8x4xf32>
    %404 = arith.addf %49, %403 : vector<8x4xf32>
    %c0_116 = arith.constant 0 : index
    %c0_117 = arith.constant 0 : index
    %405 = vector.load %arg16[%c0_116, %c0_117] : memref<8x4xf32, #tpu.memory_space<vmem>>, vector<8x4xf32>
    tpu.vector_store %arg16[%c0_116, %c0_117], %404 {strides = array<i32>} : memref<8x4xf32, #tpu.memory_space<vmem>>, vector<8x4xf32>,
    %c0_118 = arith.constant 0 : index
    %c0_119 = arith.constant 0 : index
    %c0_120 = arith.constant 0 : index
    %406 = vector.load %arg17[%c0_118, %c0_119, %c0_120] : memref<2x8x32xf32, #tpu.memory_space<vmem>>, vector<1x8x32xf32>
    %407 = vector.shape_cast %406 : vector<1x8x32xf32> to vector<8x32xf32>
    %408 = vector.shape_cast %377 : vector<8x32xf32> to vector<1x8x32xf32>
    tpu.vector_store %arg17[%c0_118, %c0_119, %c0_120], %408 {strides = array<i32>} : memref<2x8x32xf32, #tpu.memory_space<vmem>>, vector<1x8x32xf32>,
    %c0_121 = arith.constant 0 : index
    %c0_122 = arith.constant 0 : index
    %c0_123 = arith.constant 0 : index
    %409 = vector.load %arg18[%c0_121, %c0_122, %c0_123] : memref<2x8x32xf32, #tpu.memory_space<vmem>>, vector<1x8x32xf32>
    %410 = vector.shape_cast %409 : vector<1x8x32xf32> to vector<8x32xf32>
    %411 = vector.shape_cast %374 : vector<8x32xf32> to vector<1x8x32xf32>
    tpu.vector_store %arg18[%c0_121, %c0_122, %c0_123], %411 {strides = array<i32>} : memref<2x8x32xf32, #tpu.memory_space<vmem>>, vector<1x8x32xf32>,
    %c1_124 = arith.constant 1 : index
    %c0_125 = arith.constant 0 : index
    %c0_126 = arith.constant 0 : index
    %412 = vector.load %arg17[%c1_124, %c0_125, %c0_126] : memref<2x8x32xf32, #tpu.memory_space<vmem>>, vector<1x8x32xf32>
    %413 = vector.shape_cast %412 : vector<1x8x32xf32> to vector<8x32xf32>
    %414 = vector.shape_cast %398 : vector<8x32xf32> to vector<1x8x32xf32>
    tpu.vector_store %arg17[%c1_124, %c0_125, %c0_126], %414 {strides = array<i32>} : memref<2x8x32xf32, #tpu.memory_space<vmem>>, vector<1x8x32xf32>,
    %c1_127 = arith.constant 1 : index
    %c0_128 = arith.constant 0 : index
    %c0_129 = arith.constant 0 : index
    %415 = vector.load %arg18[%c1_127, %c0_128, %c0_129] : memref<2x8x32xf32, #tpu.memory_space<vmem>>, vector<1x8x32xf32>
    %416 = vector.shape_cast %415 : vector<1x8x32xf32> to vector<8x32xf32>
    %417 = vector.shape_cast %395 : vector<8x32xf32> to vector<1x8x32xf32>
    tpu.vector_store %arg18[%c1_127, %c0_128, %c0_129], %417 {strides = array<i32>} : memref<2x8x32xf32, #tpu.memory_space<vmem>>, vector<1x8x32xf32>,
    return
  }
  func.func @transform_0(%arg0: i32) -> (i32, i32, i32) {
    %c0_i32 = arith.constant 0 : i32
    %c0_i32_0 = arith.constant 0 : i32
    %c0_i32_1 = arith.constant 0 : i32
    return %c0_i32, %arg0, %c0_i32_0 : i32, i32, i32
  }
  func.func @transform_1(%arg0: i32) -> (i32, i32) {
    %c0_i32 = arith.constant 0 : i32
    %c0_i32_0 = arith.constant 0 : i32
    %c0_i32_1 = arith.constant 0 : i32
    return %c0_i32, %c0_i32_0 : i32, i32
  }
  func.func @transform_2(%arg0: i32) -> (i32, i32) {
    %c0_i32 = arith.constant 0 : i32
    %c0_i32_0 = arith.constant 0 : i32
    %c0_i32_1 = arith.constant 0 : i32
    return %c0_i32, %c0_i32_0 : i32, i32
  }
  func.func @transform_3(%arg0: i32) -> (i32, i32, i32) {
    %c0_i32 = arith.constant 0 : i32
    %c0_i32_0 = arith.constant 0 : i32
    %c0_i32_1 = arith.constant 0 : i32
    %c0_i32_2 = arith.constant 0 : i32
    return %c0_i32, %c0_i32_0, %c0_i32_1 : i32, i32, i32
  }
  func.func @transform_4(%arg0: i32) -> (i32, i32, i32) {
    %c0_i32 = arith.constant 0 : i32
    %c0_i32_0 = arith.constant 0 : i32
    %c0_i32_1 = arith.constant 0 : i32
    %c0_i32_2 = arith.constant 0 : i32
    return %c0_i32, %c0_i32_0, %c0_i32_1 : i32, i32, i32
  }
  func.func @transform_5(%arg0: i32) -> (i32, i32, i32) {
    %c0_i32 = arith.constant 0 : i32
    %c0_i32_0 = arith.constant 0 : i32
    %c0_i32_1 = arith.constant 0 : i32
    return %c0_i32, %arg0, %c0_i32_0 : i32, i32, i32
  }
  func.func @transform_6(%arg0: i32) -> (i32, i32, i32) {
    %c0_i32 = arith.constant 0 : i32
    %c0_i32_0 = arith.constant 0 : i32
    %c0_i32_1 = arith.constant 0 : i32
    return %c0_i32, %arg0, %c0_i32_0 : i32, i32, i32
  }
  func.func @transform_7(%arg0: i32) -> (i32, i32) {
    %c0_i32 = arith.constant 0 : i32
    %c0_i32_0 = arith.constant 0 : i32
    return %arg0, %c0_i32 : i32, i32
  }
  func.func @transform_8(%arg0: i32) -> (i32, i32) {
    %c0_i32 = arith.constant 0 : i32
    %c0_i32_0 = arith.constant 0 : i32
    %c0_i32_1 = arith.constant 0 : i32
    return %c0_i32, %c0_i32_0 : i32, i32
  }
  func.func @transform_9(%arg0: i32) -> (i32, i32) {
    %c0_i32 = arith.constant 0 : i32
    %c0_i32_0 = arith.constant 0 : i32
    %c0_i32_1 = arith.constant 0 : i32
    return %c0_i32, %c0_i32_0 : i32, i32
  }
  func.func @transform_10(%arg0: i32) -> (i32, i32, i32) {
    %c0_i32 = arith.constant 0 : i32
    %c0_i32_0 = arith.constant 0 : i32
    %c0_i32_1 = arith.constant 0 : i32
    %c0_i32_2 = arith.constant 0 : i32
    return %c0_i32, %c0_i32_0, %c0_i32_1 : i32, i32, i32
  }
  func.func @transform_11(%arg0: i32) -> (i32, i32, i32) {
    %c0_i32 = arith.constant 0 : i32
    %c0_i32_0 = arith.constant 0 : i32
    %c0_i32_1 = arith.constant 0 : i32
    %c0_i32_2 = arith.constant 0 : i32
    return %c0_i32, %c0_i32_0, %c0_i32_1 : i32, i32, i32
  }
  func.func @transform_12(%arg0: i32) -> (i32, i32) {
    %c0_i32 = arith.constant 0 : i32
    %c0_i32_0 = arith.constant 0 : i32
    %c0_i32_1 = arith.constant 0 : i32
    return %c0_i32, %c0_i32_0 : i32, i32
  }
  func.func @transform_13(%arg0: i32) -> (i32, i32) {
    %c0_i32 = arith.constant 0 : i32
    %c0_i32_0 = arith.constant 0 : i32
    %c0_i32_1 = arith.constant 0 : i32
    return %c0_i32, %c0_i32_0 : i32, i32
  }
  func.func @transform_14(%arg0: i32) -> (i32, i32) {
    %c0_i32 = arith.constant 0 : i32
    %c0_i32_0 = arith.constant 0 : i32
    %c0_i32_1 = arith.constant 0 : i32
    return %c0_i32, %c0_i32_0 : i32, i32
  }
  func.func @transform_15(%arg0: i32) -> (i32, i32) {
    %c0_i32 = arith.constant 0 : i32
    %c0_i32_0 = arith.constant 0 : i32
    return %arg0, %c0_i32 : i32, i32
  }
  func.func @transform_16(%arg0: i32) -> (i32, i32, i32) {
    %c0_i32 = arith.constant 0 : i32
    %c0_i32_0 = arith.constant 0 : i32
    %c0_i32_1 = arith.constant 0 : i32
    return %c0_i32, %arg0, %c0_i32_0 : i32, i32, i32
  }
  func.func @transform_17(%arg0: i32) -> (i32, i32, i32) {
    %c0_i32 = arith.constant 0 : i32
    %c0_i32_0 = arith.constant 0 : i32
    %c0_i32_1 = arith.constant 0 : i32
    return %c0_i32, %arg0, %c0_i32_0 : i32, i32, i32
  }
}

</mosaic_0001>

<llo_original>
// kernel: forward.1
$region0: #{forward.1}
  #allocation0 [shape = 'u32[]', space=smem, size = 0x4, offset = 0x4, fixed_abs, tag = 'smem constant byte address 0x4 - core index']
  #allocation1 [shape = 'u32[72,128]{1,0:T(1,128)}', space=vmem, size = 0x9000, scoped, tag = 'internal scratch']
  #allocation2 [shape = 'f32[64,128]{1,0:T(8,128)}', space=vmem, size = 0x8000, scoped, tag = 'scratch operand']
  #allocation3 [shape = 'f32[8,256]{1,0:T(8,128)}', space=vmem, size = 0x2000, scoped, tag = 'scratch operand']
  %s0 = inlined_call_operand.vmem [shape: f32[8,8,8], index: 0, kind: input, shape index: {}]
  %s1 = inlined_call_operand.vmem [shape: bf16[8,128], index: 1, kind: input, shape index: {}]
  %s2 = inlined_call_operand.vmem [shape: bf16[32,128], index: 2, kind: input, shape index: {}]
  %s3 = inlined_call_operand.vmem [shape: bf16[1,64,128], index: 3, kind: input, shape index: {}]
  %s4 = inlined_call_operand.vmem [shape: f32[2,1,128], index: 4, kind: input, shape index: {}]
  %s5 = inlined_call_operand.vmem [shape: f32[2,8,32], index: 5, kind: input, shape index: {}]
  %s6 = inlined_call_operand.vmem [shape: f32[2,8,32], index: 6, kind: input, shape index: {}]
  %s7 = inlined_call_operand.vmem [shape: f32[8,16], index: 7, kind: input, shape index: {}]
  %s8 = inlined_call_operand.vmem [shape: f32[16,32], index: 8, kind: input, shape index: {}]
  %s9 = inlined_call_operand.vmem [shape: f32[1,32], index: 9, kind: input, shape index: {}]
  %s10 = inlined_call_operand.vmem [shape: f32[2,32,32], index: 10, kind: input, shape index: {}]
  %s11 = inlined_call_operand.vmem [shape: f32[2,1,32], index: 11, kind: input, shape index: {}]
  %s12 = inlined_call_operand.vmem [shape: bf16[256,4], index: 12, kind: input, shape index: {}]
  %s13 = inlined_call_operand.vmem [shape: f32[32,4], index: 13, kind: input, shape index: {}]
  %s14 = inlined_call_operand.vmem [shape: f32[1,4], index: 14, kind: input, shape index: {}]
  %s15 = inlined_call_operand.vmem [shape: f32[8,4], index: 15, kind: output, shape index: {0}]
  %s16 = inlined_call_operand.vmem [shape: f32[2,8,32], index: 16, kind: output, shape index: {1}]
  %s17 = inlined_call_operand.vmem [shape: f32[2,8,32], index: 17, kind: output, shape index: {2}]
  %18 = xla_tuple %s15, %s16, %s17
  %s19 = sld [smem:[#allocation0]]
  $region86: #{forward.1} parent=0
    _
  %s21 = ssub.s32 1, %s19
  %s22 = scalar_select 0, %s21, %s19
  // Predicated region
  $region2: #{forward.1} parent=0 // pred_check
    _
  $region3: #{forward.1} parent=0 // pred_check_branch
    %24 = sbr.rel (0) target = $region5
  $region4: #{forward.1} parent=0 // pred_region
    _
  $region5: #{forward.1} parent=0 // pred_fallthru
    _
  // Predicated region
  $region6: #{forward.1} parent=0 // pred_check
    _
  $region7: #{forward.1} parent=0 // pred_check_branch
    %26 = sbr.rel (0) target = $region9
  $region8: #{forward.1} parent=0 // pred_region
    _
  $region9: #{forward.1} parent=0 // pred_fallthru
    _
  // Predicated region
  $region10: #{forward.1} parent=0 // pred_check
    _
  $region11: #{forward.1} parent=0 // pred_check_branch
    %28 = sbr.rel (0) target = $region13
  $region12: #{forward.1} parent=0 // pred_region
    _
  $region13: #{forward.1} parent=0 // pred_fallthru
    _
  // Predicated region
  $region14: #{forward.1} parent=0 // pred_check
    _
  $region15: #{forward.1} parent=0 // pred_check_branch
    %30 = sbr.rel (0) target = $region17
  $region16: #{forward.1} parent=0 // pred_region
    _
  $region17: #{forward.1} parent=0 // pred_fallthru
    _
  // Predicated region
  $region18: #{forward.1} parent=0 // pred_check
    _
  $region19: #{forward.1} parent=0 // pred_check_branch
    %32 = sbr.rel (0) target = $region21
  $region20: #{forward.1} parent=0 // pred_region
    _
  $region21: #{forward.1} parent=0 // pred_fallthru
    _
  // Predicated region
  $region22: #{forward.1} parent=0 // pred_check
    _
  $region23: #{forward.1} parent=0 // pred_check_branch
    %34 = sbr.rel (0) target = $region25
  $region24: #{forward.1} parent=0 // pred_region
    _
  $region25: #{forward.1} parent=0 // pred_fallthru
    _
  // Predicated region
  $region26: #{forward.1} parent=0 // pred_check
    _
  $region27: #{forward.1} parent=0 // pred_check_branch
    %36 = sbr.rel (0) target = $region29
  $region28: #{forward.1} parent=0 // pred_region
    _
  $region29: #{forward.1} parent=0 // pred_fallthru
    _
  // Predicated region
  $region30: #{forward.1} parent=0 // pred_check
    _
  $region31: #{forward.1} parent=0 // pred_check_branch
    %38 = sbr.rel (0) target = $region33
  $region32: #{forward.1} parent=0 // pred_region
    _
  $region33: #{forward.1} parent=0 // pred_fallthru
    _
  // Predicated region
  $region34: #{forward.1} parent=0 // pred_check
    _
  $region35: #{forward.1} parent=0 // pred_check_branch
    %40 = sbr.rel (0) target = $region37
  $region36: #{forward.1} parent=0 // pred_region
    _
  $region37: #{forward.1} parent=0 // pred_fallthru
    _
  // Predicated region
  $region38: #{forward.1} parent=0 // pred_check
    _
  $region39: #{forward.1} parent=0 // pred_check_branch
    %42 = sbr.rel (0) target = $region41
  $region40: #{forward.1} parent=0 // pred_region
    _
  $region41: #{forward.1} parent=0 // pred_fallthru
    _
  // Predicated region
  $region42: #{forward.1} parent=0 // pred_check
    _
  $region43: #{forward.1} parent=0 // pred_check_branch
    %44 = sbr.rel (0) target = $region45
  $region44: #{forward.1} parent=0 // pred_region
    _
  $region45: #{forward.1} parent=0 // pred_fallthru
    _
  // Predicated region
  $region46: #{forward.1} parent=0 // pred_check
    _
  $region47: #{forward.1} parent=0 // pred_check_branch
    %46 = sbr.rel (0) target = $region49
  $region48: #{forward.1} parent=0 // pred_region
    _
  $region49: #{forward.1} parent=0 // pred_fallthru
    _
  // Predicated region
  $region50: #{forward.1} parent=0 // pred_check
    _
  $region51: #{forward.1} parent=0 // pred_check_branch
    %48 = sbr.rel (0) target = $region53
  $region52: #{forward.1} parent=0 // pred_region
    _
  $region53: #{forward.1} parent=0 // pred_fallthru
    _
  // Predicated region
  $region54: #{forward.1} parent=0 // pred_check
    _
  $region55: #{forward.1} parent=0 // pred_check_branch
    %50 = sbr.rel (0) target = $region57
  $region56: #{forward.1} parent=0 // pred_region
    _
  $region57: #{forward.1} parent=0 // pred_fallthru
    _
  // Predicated region
  $region58: #{forward.1} parent=0 // pred_check
    _
  $region59: #{forward.1} parent=0 // pred_check_branch
    %52 = sbr.rel (0) target = $region61
  $region60: #{forward.1} parent=0 // pred_region
    _
  $region61: #{forward.1} parent=0 // pred_fallthru
    _
  %v54 = vld [vmem:[%s0] sm:$0xff]
  %v55 = vld [vmem:[%s0 + $0x8] sm:$0xff]
  %v56 = vld [vmem:[%s0 + $0x10] sm:$0xff]
  %v57 = vld [vmem:[%s0 + $0x18] sm:$0xff]
  %v58 = vld [vmem:[%s0 + $0x20] sm:$0xff]
  %v59 = vld [vmem:[%s0 + $0x28] sm:$0xff]
  %v60 = vld [vmem:[%s0 + $0x30] sm:$0xff]
  %v61 = vld [vmem:[%s0 + $0x38] sm:$0xff]
  %v62 = vpack.c.bf16 %v55, %v54
  %v63 = vpack.c.bf16 %v57, %v56
  %v64 = vpack.c.bf16 %v59, %v58
  %v65 = vpack.c.bf16 %v61, %v60
  %v66 = vld [vmem:[%s1] sm:$0xf]
  %v67 = vld [vmem:[%s4] sm:$0x1]
  %v69 = vperm.slane %v67, 0
  %vm71 = vcmask 64512
  %v73 = vsel %vm71, %v62, 0
  %v76 = vsel %vm71, %v63, 0
  %v79 = vsel %vm71, %v64, 0
  %v82 = vsel %vm71, %v65, 0
  %vm84 = vcmask 1043456
  %v86 = vsel %vm84, %v66, 0
  %88 = vmatpush.bf16.msra.mxu0 0
  %89 = vmatpush.bf16.msra.mxu0 0
  %90 = vmatpush.bf16.msra.mxu0 0
  %91 = vmatpush.bf16.msra.mxu0 0
  %92 = vmatpush.bf16.msra.mxu0 0
  %93 = vmatpush.bf16.msra.mxu0 0
  %94 = vmatpush.bf16.msra.mxu0 0
  %95 = vmatpush.bf16.msra.mxu0 %v86
  %96 = vmatmul.bf16.gmra.mxu0 %v73
  %v97 = vpop.f32.mrf.mxu0
  %v98 = vadd.f32 %v69, %v97
  %v99 = vpop.f32.mrf.mxu0
  %v100 = vadd.f32 %v69, %v99
  %101 = vmatmul.bf16.gmra.mxu0 %v76
  %v102 = vpop.f32.mrf.mxu0
  %v103 = vadd.f32 %v69, %v102
  %v104 = vpop.f32.mrf.mxu0
  %v105 = vadd.f32 %v69, %v104
  %106 = vmatmul.bf16.gmra.mxu0 %v79
  %v107 = vpop.f32.mrf.mxu0
  %v108 = vadd.f32 %v69, %v107
  %v109 = vpop.f32.mrf.mxu0
  %v110 = vadd.f32 %v69, %v109
  %111 = vmatmul.bf16.gmra.mxu0 %v82
  %v112 = vpop.f32.mrf.mxu0
  %v113 = vadd.f32 %v69, %v112
  %v114 = vpop.f32.mrf.mxu0
  %v115 = vadd.f32 %v69, %v114
  %116 = vdwg.mxu0
  %117 = vst [vmem:[#allocation2] sm:$0xff] %v98
  %118 = vst [vmem:[#allocation2 + $0x8] sm:$0xff] %v100
  %119 = vst [vmem:[#allocation2 + $0x10] sm:$0xff] %v103
  %120 = vst [vmem:[#allocation2 + $0x18] sm:$0xff] %v105
  %121 = vst [vmem:[#allocation2 + $0x20] sm:$0xff] %v108
  %122 = vst [vmem:[#allocation2 + $0x28] sm:$0xff] %v110
  %123 = vst [vmem:[#allocation2 + $0x30] sm:$0xff] %v113
  %124 = vst [vmem:[#allocation2 + $0x38] sm:$0xff] %v115
  %v125 = vld [vmem:[%s7] sm:$0xff]
  %v126 = vld [vmem:[%s8] sm:$0xff]
  %v127 = vld [vmem:[%s8 + $0x8] sm:$0xff]
  %v128 = vld [vmem:[%s9] sm:$0x1]
  %v130 = vperm.slane %v128, 0
  %vm132 = vcmask 130048
  %v134 = vsel %vm132, %v125, 0
  %136 = vmatpush.msra.mxu0 0.0
  %137 = vmatpush.msra.mxu0 0.0
  %138 = vmatpush.msra.mxu0 0.0
  %139 = vmatpush.msra.mxu0 0.0
  %140 = vmatpush.msra.mxu0 0.0
  %141 = vmatpush.msra.mxu0 0.0
  %142 = vmatpush.msra.mxu0 0.0
  %143 = vmatpush.msra.mxu0 0.0
  %144 = vmatpush.msra.mxu0 0.0
  %145 = vmatpush.msra.mxu0 0.0
  %146 = vmatpush.msra.mxu0 0.0
  %147 = vmatpush.msra.mxu0 0.0
  %148 = vmatpush.msra.mxu0 0.0
  %149 = vmatpush.msra.mxu0 0.0
  %150 = vmatpush.msra.mxu0 %v127
  %151 = vmatpush.msra.mxu0 %v126
  %152 = vmatmul.f32.gmra.mxu0 %v134
  %v153 = vpop.f32.mrf.mxu0
  %v154 = vadd.f32 %v130, %v153
  %155 = vdwg.mxu0
  %vm156 = vcmp.gt.f32.partialorder %v154, 0.0
  %v157 = vmul.f32 %v154, 0.2
  %v158 = vsel %vm156, %v154, %v157
  %v159 = vld [vmem:[%s10] sm:$0xff]
  %v160 = vld [vmem:[%s10 + $0x8] sm:$0xff]
  %v161 = vld [vmem:[%s10 + $0x10] sm:$0xff]
  %v162 = vld [vmem:[%s10 + $0x18] sm:$0xff]
  %v163 = vld [vmem:[%s11] sm:$0x1]
  %v165 = vperm.slane %v163, 0
  %vm167 = vcmask 261120
  %v169 = vsel %vm167, %v158, 0
  %171 = vmatpush.msra.mxu0 0.0
  %172 = vmatpush.msra.mxu0 0.0
  %173 = vmatpush.msra.mxu0 0.0
  %174 = vmatpush.msra.mxu0 0.0
  %175 = vmatpush.msra.mxu0 0.0
  %176 = vmatpush.msra.mxu0 0.0
  %177 = vmatpush.msra.mxu0 0.0
  %178 = vmatpush.msra.mxu0 0.0
  %179 = vmatpush.msra.mxu0 0.0
  %180 = vmatpush.msra.mxu0 0.0
  %181 = vmatpush.msra.mxu0 0.0
  %182 = vmatpush.msra.mxu0 0.0
  %183 = vmatpush.msra.mxu0 %v162
  %184 = vmatpush.msra.mxu0 %v161
  %185 = vmatpush.msra.mxu0 %v160
  %186 = vmatpush.msra.mxu0 %v159
  %187 = vmatmul.f32.gmra.mxu0 %v169
  %v188 = vpop.f32.mrf.mxu0
  %v189 = vadd.f32 %v165, %v188
  %190 = vdwg.mxu0
  %vm191 = vcmp.gt.f32.partialorder %v189, 0.0
  %v192 = vmul.f32 %v189, 0.2
  %v193 = vsel %vm191, %v189, %v192
  %s194 = scalar_lea.vmem %s10, 32
  %v195 = vld [vmem:[%s194] sm:$0xff]
  %v196 = vld [vmem:[%s194 + $0x8] sm:$0xff]
  %v197 = vld [vmem:[%s194 + $0x10] sm:$0xff]
  %v198 = vld [vmem:[%s194 + $0x18] sm:$0xff]
  %s199 = scalar_lea.vmem %s11, 1
  %v200 = vld [vmem:[%s199] sm:$0x1]
  %v202 = vperm.slane %v200, 0
  %v205 = vsel %vm167, %v193, 0
  %207 = vmatpush.msra.mxu0 0.0
  %208 = vmatpush.msra.mxu0 0.0
  %209 = vmatpush.msra.mxu0 0.0
  %210 = vmatpush.msra.mxu0 0.0
  %211 = vmatpush.msra.mxu0 0.0
  %212 = vmatpush.msra.mxu0 0.0
  %213 = vmatpush.msra.mxu0 0.0
  %214 = vmatpush.msra.mxu0 0.0
  %215 = vmatpush.msra.mxu0 0.0
  %216 = vmatpush.msra.mxu0 0.0
  %217 = vmatpush.msra.mxu0 0.0
  %218 = vmatpush.msra.mxu0 0.0
  %219 = vmatpush.msra.mxu0 %v198
  %220 = vmatpush.msra.mxu0 %v197
  %221 = vmatpush.msra.mxu0 %v196
  %222 = vmatpush.msra.mxu0 %v195
  %223 = vmatmul.f32.gmra.mxu0 %v205
  %v224 = vpop.f32.mrf.mxu0
  %v225 = vadd.f32 %v202, %v224
  %226 = vdwg.mxu0
  %vm227 = vcmp.gt.f32.partialorder %v225, 0.0
  %v228 = vmul.f32 %v225, 0.2
  %v229 = vsel %vm227, %v225, %v228
  %v230 = vld [vmem:[%s13] sm:$0xff]
  %v231 = vld [vmem:[%s13 + $0x8] sm:$0xff]
  %v232 = vld [vmem:[%s13 + $0x10] sm:$0xff]
  %v233 = vld [vmem:[%s13 + $0x18] sm:$0xff]
  %v234 = vld [vmem:[%s14] sm:$0x1]
  %v236 = vperm.slane %v234, 0
  %v239 = vsel %vm167, %v229, 0
  %241 = vmatpush.msra.mxu0 0.0
  %242 = vmatpush.msra.mxu0 0.0
  %243 = vmatpush.msra.mxu0 0.0
  %244 = vmatpush.msra.mxu0 0.0
  %245 = vmatpush.msra.mxu0 0.0
  %246 = vmatpush.msra.mxu0 0.0
  %247 = vmatpush.msra.mxu0 0.0
  %248 = vmatpush.msra.mxu0 0.0
  %249 = vmatpush.msra.mxu0 0.0
  %250 = vmatpush.msra.mxu0 0.0
  %251 = vmatpush.msra.mxu0 0.0
  %252 = vmatpush.msra.mxu0 0.0
  %253 = vmatpush.msra.mxu0 %v233
  %254 = vmatpush.msra.mxu0 %v232
  %255 = vmatpush.msra.mxu0 %v231
  %256 = vmatpush.msra.mxu0 %v230
  %257 = vmatmul.f32.gmra.mxu0 %v239
  %v258 = vpop.f32.mrf.mxu0
  %v259 = vadd.f32 %v236, %v258
  %260 = vdwg.mxu0
  %v261 = vld [vmem:[%s2] sm:$0xf]
  %v262 = vld [vmem:[%s2 + $0x4] sm:$0xf]
  %v263 = vld [vmem:[%s2 + $0x8] sm:$0xf]
  %v264 = vld [vmem:[%s2 + $0xc] sm:$0xf]
  %v265 = vld [vmem:[%s3] sm:$0xf]
  %v266 = vld [vmem:[%s3 + $0x4] sm:$0xf]
  %v267 = vld [vmem:[%s3 + $0x8] sm:$0xf]
  %v268 = vld [vmem:[%s3 + $0xc] sm:$0xf]
  %v269 = vld [vmem:[%s3 + $0x10] sm:$0xf]
  %v270 = vld [vmem:[%s3 + $0x14] sm:$0xf]
  %v271 = vld [vmem:[%s3 + $0x18] sm:$0xf]
  %v272 = vld [vmem:[%s3 + $0x1c] sm:$0xf]
  %s273 = scalar_lea.vmem %s4, 1
  %v274 = vld [vmem:[%s273] sm:$0x1]
  %v275 = vld [vmem:[%s5] sm:$0xff]
  %s276 = scalar_lea.vmem %s5, 8
  %v277 = vld [vmem:[%s276] sm:$0xff]
  %v278 = vld [vmem:[%s6] sm:$0xff]
  %s279 = scalar_lea.vmem %s6, 8
  %v280 = vld [vmem:[%s279] sm:$0xff]
  %v281 = vpack.c.bf16 %v275, %v275
  %v282 = vpack.c.bf16 %v277, %v277
  %v283 = vld [vmem:[#allocation2] sm:$0xff]
  %v288 = vunpack.c.l.b16 %v261
  %v289 = vunpack.c.l.b16 %v262
  %v290 = vunpack.c.l.b16 %v263
  %v291 = vunpack.c.l.b16 %v264
  %v292 = vpack.c.b16 %v289, %v288
  %v293 = vpack.c.b16 %v291, %v290
  %v297 = vsel %vm167, %v281, 0
  %299 = vmatpush.bf16.msra.mxu0 0
  %300 = vmatpush.bf16.msra.mxu0 0
  %301 = vmatpush.bf16.msra.mxu0 0
  %302 = vmatpush.bf16.msra.mxu0 0
  %303 = vmatpush.bf16.msra.mxu0 0
  %304 = vmatpush.bf16.msra.mxu0 0
  %305 = vmatpush.bf16.msra.mxu0 %v293
  %306 = vmatpush.bf16.msra.mxu0 %v292
  %307 = vmatmul.bf16.gmra.mxu0 %v297
  %v308 = vpop.f32.mrf.mxu0
  %v309 = vadd.f32 0.0, %v308
  %v310 = vpop.f32.mrf.mxu0
  %311 = vdwg.mxu0
  %v312 = vadd.f32 %v283, %v309
  %v313 = vxor.u32 %v312, 2147483648
  %v314 = vmul.f32 %v313, 1.442695
  %v315 = vpow.pop %v314
  %v316 = vadd.f32 %v315, 1.0
  %v317 = vrcp.pop %v316
  %v318 = vmul.f32 %v316, %v317
  %v319 = vsub.f32 1.0, %v318
  %v320 = vmul.f32 %v317, %v319
  %v321 = vadd.f32 %v317, %v320
  %vm322 = vweird.f32 %v316
  %vm323 = vweird.f32 %v317
  %vm324 = vmor %vm322, %vm323
  %v325 = vsel %vm324, %v317, %v321
  %v326 = vand.u32 2147483647, %v316
  %vm327 = vcmp.eq.f32.partialorder %v326, 8.507059e+37
  %v328 = vand.u32 %v316, 2147483648
  %v329 = vor.u32 1.1754944e-38, %v328
  %v330 = vsel %vm327, %v329, %v325
  %v331 = vmul.f32 1.0, %v330
  %v332 = vtanh.pop %v312
  %334 = vrot.lane.b32.xlu0 %v278, 32
  %v335 = vpop.permute.xlu0 %334
  %v337 = vmul.f32 %v331, %v335
  %339 = vrot.lane.b32.xlu0 %v332, 32
  %v340 = vpop.permute.xlu0 %339
  %v342 = vmul.f32 %v331, %v340
  %344 = vrot.lane.b32.xlu0 %v342, 32
  %v345 = vpop.permute.xlu0 %344
  %v347 = vadd.f32 %v337, %v345
  %v348 = vtanh.pop %v347
  %350 = vrot.lane.b32.xlu0 %v348, 32
  %v351 = vpop.permute.xlu0 %350
  %v353 = vmul.f32 %v331, %v351
  %v354 = vpack.c.bf16 %v353, %v353
  %v356 = vunpack.c.l.b16 %v354
  %v357 = vpack.c.b16 %v356, %v356
  %358 = vrot.lane.b32.xlu0 %v357, 64
  %v359 = vpop.permute.xlu0 %358
  %v361 = vunpack.c.l.b16 %v282
  %v362 = vpack.c.b16 %v361, %v361
  %363 = vrot.lane.b32.xlu0 %v362, 32
  %v364 = vpop.permute.xlu0 %363
  %v367 = vsel %vm167, %v359, %v364
  %v369 = vperm.slane %v274, 0
  %v379 = vunpack.c.l.b16 %v265
  %v380 = vunpack.c.l.b16 %v266
  %v381 = vunpack.c.l.b16 %v267
  %v382 = vunpack.c.l.b16 %v268
  %v383 = vunpack.c.l.b16 %v269
  %v384 = vunpack.c.l.b16 %v270
  %v385 = vunpack.c.l.b16 %v271
  %v386 = vunpack.c.l.b16 %v272
  %v387 = vpack.c.b16 %v380, %v379
  %v388 = vpack.c.b16 %v382, %v381
  %v389 = vpack.c.b16 %v384, %v383
  %v390 = vpack.c.b16 %v386, %v385
  %vm395 = vcmask 523264
  %v396 = vsel %vm395, %v367, 0
  %398 = vmatpush.bf16.msra.mxu0 0
  %399 = vmatpush.bf16.msra.mxu0 0
  %400 = vmatpush.bf16.msra.mxu0 0
  %401 = vmatpush.bf16.msra.mxu0 0
  %402 = vmatpush.bf16.msra.mxu0 %v390
  %403 = vmatpush.bf16.msra.mxu0 %v389
  %404 = vmatpush.bf16.msra.mxu0 %v388
  %405 = vmatpush.bf16.msra.mxu0 %v387
  %406 = vmatmul.bf16.gmra.mxu0 %v396
  %v407 = vpop.f32.mrf.mxu0
  %v408 = vadd.f32 %v369, %v407
  %v409 = vpop.f32.mrf.mxu0
  %410 = vdwg.mxu0
  %v411 = vxor.u32 %v408, 2147483648
  %v412 = vmul.f32 %v411, 1.442695
  %v413 = vpow.pop %v412
  %v414 = vadd.f32 %v413, 1.0
  %v415 = vrcp.pop %v414
  %v416 = vmul.f32 %v414, %v415
  %v417 = vsub.f32 1.0, %v416
  %v418 = vmul.f32 %v415, %v417
  %v419 = vadd.f32 %v415, %v418
  %vm420 = vweird.f32 %v414
  %vm421 = vweird.f32 %v415
  %vm422 = vmor %vm420, %vm421
  %v423 = vsel %vm422, %v415, %v419
  %v424 = vand.u32 2147483647, %v414
  %vm425 = vcmp.eq.f32.partialorder %v424, 8.507059e+37
  %v426 = vand.u32 %v414, 2147483648
  %v427 = vor.u32 1.1754944e-38, %v426
  %v428 = vsel %vm425, %v427, %v423
  %v429 = vmul.f32 1.0, %v428
  %v430 = vtanh.pop %v408
  %432 = vrot.lane.b32.xlu0 %v280, 32
  %v433 = vpop.permute.xlu0 %432
  %v435 = vmul.f32 %v429, %v433
  %437 = vrot.lane.b32.xlu0 %v430, 32
  %v438 = vpop.permute.xlu0 %437
  %v440 = vmul.f32 %v429, %v438
  %442 = vrot.lane.b32.xlu0 %v440, 32
  %v443 = vpop.permute.xlu0 %442
  %v445 = vadd.f32 %v435, %v443
  %v446 = vtanh.pop %v445
  %448 = vrot.lane.b32.xlu0 %v446, 32
  %v449 = vpop.permute.xlu0 %448
  %v451 = vmul.f32 %v429, %v449
  %v452 = vpack.c.bf16 %v451, %v451
  %454 = vrot.lane.b32.xlu0 %v451, 64
  %v455 = vpop.permute.xlu0 %454
  %457 = vst.msk [vmem:[#allocation3] sm:$0xff] %vm167, %v455
  %v458 = vld [vmem:[#allocation2 + $0x8] sm:$0xff]
  %v459 = vsel %vm167, %v359, 0
  %461 = vmatpush.bf16.msra.mxu0 0
  %462 = vmatpush.bf16.msra.mxu0 0
  %463 = vmatpush.bf16.msra.mxu0 0
  %464 = vmatpush.bf16.msra.mxu0 0
  %465 = vmatpush.bf16.msra.mxu0 0
  %466 = vmatpush.bf16.msra.mxu0 0
  %467 = vmatpush.bf16.msra.mxu0 %v293
  %468 = vmatpush.bf16.msra.mxu0 %v292
  %469 = vmatmul.bf16.gmra.mxu0 %v459
  %v470 = vpop.f32.mrf.mxu0
  %v471 = vadd.f32 0.0, %v470
  %v472 = vpop.f32.mrf.mxu0
  %473 = vdwg.mxu0
  %v474 = vadd.f32 %v458, %v471
  %v475 = vxor.u32 %v474, 2147483648
  %v476 = vmul.f32 %v475, 1.442695
  %v477 = vpow.pop %v476
  %v478 = vadd.f32 %v477, 1.0
  %v479 = vrcp.pop %v478
  %v480 = vmul.f32 %v478, %v479
  %v481 = vsub.f32 1.0, %v480
  %v482 = vmul.f32 %v479, %v481
  %v483 = vadd.f32 %v479, %v482
  %vm484 = vweird.f32 %v478
  %vm485 = vweird.f32 %v479
  %vm486 = vmor %vm484, %vm485
  %v487 = vsel %vm486, %v479, %v483
  %v488 = vand.u32 2147483647, %v478
  %vm489 = vcmp.eq.f32.partialorder %v488, 8.507059e+37
  %v490 = vand.u32 %v478, 2147483648
  %v491 = vor.u32 1.1754944e-38, %v490
  %v492 = vsel %vm489, %v491, %v487
  %v493 = vmul.f32 1.0, %v492
  %v494 = vtanh.pop %v474
  %v495 = vmul.f32 %v493, %v347
  %497 = vrot.lane.b32.xlu0 %v494, 32
  %v498 = vpop.permute.xlu0 %497
  %v500 = vmul.f32 %v493, %v498
  %502 = vrot.lane.b32.xlu0 %v500, 32
  %v503 = vpop.permute.xlu0 %502
  %v505 = vadd.f32 %v495, %v503
  %v506 = vtanh.pop %v505
  %508 = vrot.lane.b32.xlu0 %v506, 32
  %v509 = vpop.permute.xlu0 %508
  %v511 = vmul.f32 %v493, %v509
  %v512 = vpack.c.bf16 %v511, %v511
  %v514 = vunpack.c.l.b16 %v512
  %v515 = vpack.c.b16 %v514, %v514
  %516 = vrot.lane.b32.xlu0 %v515, 64
  %v517 = vpop.permute.xlu0 %516
  %v519 = vunpack.c.l.b16 %v452
  %v520 = vpack.c.b16 %v519, %v519
  %521 = vrot.lane.b32.xlu0 %v520, 96
  %v522 = vpop.permute.xlu0 %521
  %v525 = vsel %vm167, %v517, %v522
  %v526 = vsel %vm395, %v525, 0
  %528 = vmatpush.bf16.msra.mxu0 0
  %529 = vmatpush.bf16.msra.mxu0 0
  %530 = vmatpush.bf16.msra.mxu0 0
  %531 = vmatpush.bf16.msra.mxu0 0
  %532 = vmatpush.bf16.msra.mxu0 %v390
  %533 = vmatpush.bf16.msra.mxu0 %v389
  %534 = vmatpush.bf16.msra.mxu0 %v388
  %535 = vmatpush.bf16.msra.mxu0 %v387
  %536 = vmatmul.bf16.gmra.mxu0 %v526
  %v537 = vpop.f32.mrf.mxu0
  %v538 = vadd.f32 %v369, %v537
  %v539 = vpop.f32.mrf.mxu0
  %540 = vdwg.mxu0
  %v541 = vxor.u32 %v538, 2147483648
  %v542 = vmul.f32 %v541, 1.442695
  %v543 = vpow.pop %v542
  %v544 = vadd.f32 %v543, 1.0
  %v545 = vrcp.pop %v544
  %v546 = vmul.f32 %v544, %v545
  %v547 = vsub.f32 1.0, %v546
  %v548 = vmul.f32 %v545, %v547
  %v549 = vadd.f32 %v545, %v548
  %vm550 = vweird.f32 %v544
  %vm551 = vweird.f32 %v545
  %vm552 = vmor %vm550, %vm551
  %v553 = vsel %vm552, %v545, %v549
  %v554 = vand.u32 2147483647, %v544
  %vm555 = vcmp.eq.f32.partialorder %v554, 8.507059e+37
  %v556 = vand.u32 %v544, 2147483648
  %v557 = vor.u32 1.1754944e-38, %v556
  %v558 = vsel %vm555, %v557, %v553
  %v559 = vmul.f32 1.0, %v558
  %v560 = vtanh.pop %v538
  %v561 = vmul.f32 %v559, %v445
  %563 = vrot.lane.b32.xlu0 %v560, 32
  %v564 = vpop.permute.xlu0 %563
  %v566 = vmul.f32 %v559, %v564
  %568 = vrot.lane.b32.xlu0 %v566, 32
  %v569 = vpop.permute.xlu0 %568
  %v571 = vadd.f32 %v561, %v569
  %v572 = vtanh.pop %v571
  %574 = vrot.lane.b32.xlu0 %v572, 32
  %v575 = vpop.permute.xlu0 %574
  %v577 = vmul.f32 %v559, %v575
  %v578 = vpack.c.bf16 %v577, %v577
  %580 = vrot.lane.b32.xlu0 %v577, 96
  %v581 = vpop.permute.xlu0 %580
  %vm583 = vcmask 523520
  %584 = vst.msk [vmem:[#allocation3] sm:$0xff] %vm583, %v581
  %v585 = vld [vmem:[#allocation2 + $0x10] sm:$0xff]
  %v586 = vsel %vm167, %v517, 0
  %588 = vmatpush.bf16.msra.mxu0 0
  %589 = vmatpush.bf16.msra.mxu0 0
  %590 = vmatpush.bf16.msra.mxu0 0
  %591 = vmatpush.bf16.msra.mxu0 0
  %592 = vmatpush.bf16.msra.mxu0 0
  %593 = vmatpush.bf16.msra.mxu0 0
  %594 = vmatpush.bf16.msra.mxu0 %v293
  %595 = vmatpush.bf16.msra.mxu0 %v292
  %596 = vmatmul.bf16.gmra.mxu0 %v586
  %v597 = vpop.f32.mrf.mxu0
  %v598 = vadd.f32 0.0, %v597
  %v599 = vpop.f32.mrf.mxu0
  %600 = vdwg.mxu0
  %v601 = vadd.f32 %v585, %v598
  %v602 = vxor.u32 %v601, 2147483648
  %v603 = vmul.f32 %v602, 1.442695
  %v604 = vpow.pop %v603
  %v605 = vadd.f32 %v604, 1.0
  %v606 = vrcp.pop %v605
  %v607 = vmul.f32 %v605, %v606
  %v608 = vsub.f32 1.0, %v607
  %v609 = vmul.f32 %v606, %v608
  %v610 = vadd.f32 %v606, %v609
  %vm611 = vweird.f32 %v605
  %vm612 = vweird.f32 %v606
  %vm613 = vmor %vm611, %vm612
  %v614 = vsel %vm613, %v606, %v610
  %v615 = vand.u32 2147483647, %v605
  %vm616 = vcmp.eq.f32.partialorder %v615, 8.507059e+37
  %v617 = vand.u32 %v605, 2147483648
  %v618 = vor.u32 1.1754944e-38, %v617
  %v619 = vsel %vm616, %v618, %v614
  %v620 = vmul.f32 1.0, %v619
  %v621 = vtanh.pop %v601
  %v622 = vmul.f32 %v620, %v505
  %624 = vrot.lane.b32.xlu0 %v621, 32
  %v625 = vpop.permute.xlu0 %624
  %v627 = vmul.f32 %v620, %v625
  %629 = vrot.lane.b32.xlu0 %v627, 32
  %v630 = vpop.permute.xlu0 %629
  %v632 = vadd.f32 %v622, %v630
  %v633 = vtanh.pop %v632
  %635 = vrot.lane.b32.xlu0 %v633, 32
  %v636 = vpop.permute.xlu0 %635
  %v638 = vmul.f32 %v620, %v636
  %v639 = vpack.c.bf16 %v638, %v638
  %v641 = vunpack.c.l.b16 %v639
  %v642 = vpack.c.b16 %v641, %v641
  %643 = vrot.lane.b32.xlu0 %v642, 64
  %v644 = vpop.permute.xlu0 %643
  %v646 = vunpack.c.l.b16 %v578
  %v647 = vpack.c.b16 %v646, %v646
  %648 = vrot.lane.b32.xlu0 %v647, 96
  %v649 = vpop.permute.xlu0 %648
  %v652 = vsel %vm167, %v644, %v649
  %v653 = vsel %vm395, %v652, 0
  %655 = vmatpush.bf16.msra.mxu0 0
  %656 = vmatpush.bf16.msra.mxu0 0
  %657 = vmatpush.bf16.msra.mxu0 0
  %658 = vmatpush.bf16.msra.mxu0 0
  %659 = vmatpush.bf16.msra.mxu0 %v390
  %660 = vmatpush.bf16.msra.mxu0 %v389
  %661 = vmatpush.bf16.msra.mxu0 %v388
  %662 = vmatpush.bf16.msra.mxu0 %v387
  %663 = vmatmul.bf16.gmra.mxu0 %v653
  %v664 = vpop.f32.mrf.mxu0
  %v665 = vadd.f32 %v369, %v664
  %v666 = vpop.f32.mrf.mxu0
  %667 = vdwg.mxu0
  %v668 = vxor.u32 %v665, 2147483648
  %v669 = vmul.f32 %v668, 1.442695
  %v670 = vpow.pop %v669
  %v671 = vadd.f32 %v670, 1.0
  %v672 = vrcp.pop %v671
  %v673 = vmul.f32 %v671, %v672
  %v674 = vsub.f32 1.0, %v673
  %v675 = vmul.f32 %v672, %v674
  %v676 = vadd.f32 %v672, %v675
  %vm677 = vweird.f32 %v671
  %vm678 = vweird.f32 %v672
  %vm679 = vmor %vm677, %vm678
  %v680 = vsel %vm679, %v672, %v676
  %v681 = vand.u32 2147483647, %v671
  %vm682 = vcmp.eq.f32.partialorder %v681, 8.507059e+37
  %v683 = vand.u32 %v671, 2147483648
  %v684 = vor.u32 1.1754944e-38, %v683
  %v685 = vsel %vm682, %v684, %v680
  %v686 = vmul.f32 1.0, %v685
  %v687 = vtanh.pop %v665
  %v688 = vmul.f32 %v686, %v571
  %690 = vrot.lane.b32.xlu0 %v687, 32
  %v691 = vpop.permute.xlu0 %690
  %v693 = vmul.f32 %v686, %v691
  %695 = vrot.lane.b32.xlu0 %v693, 32
  %v696 = vpop.permute.xlu0 %695
  %v698 = vadd.f32 %v688, %v696
  %v699 = vtanh.pop %v698
  %701 = vrot.lane.b32.xlu0 %v699, 32
  %v702 = vpop.permute.xlu0 %701
  %v704 = vmul.f32 %v686, %v702
  %v705 = vpack.c.bf16 %v704, %v704
  %vm706 = vcmask 785920
  %707 = vst.msk [vmem:[#allocation3] sm:$0xff] %vm706, %v704
  %v708 = vld [vmem:[#allocation2 + $0x18] sm:$0xff]
  %v709 = vsel %vm167, %v644, 0
  %711 = vmatpush.bf16.msra.mxu0 0
  %712 = vmatpush.bf16.msra.mxu0 0
  %713 = vmatpush.bf16.msra.mxu0 0
  %714 = vmatpush.bf16.msra.mxu0 0
  %715 = vmatpush.bf16.msra.mxu0 0
  %716 = vmatpush.bf16.msra.mxu0 0
  %717 = vmatpush.bf16.msra.mxu0 %v293
  %718 = vmatpush.bf16.msra.mxu0 %v292
  %719 = vmatmul.bf16.gmra.mxu0 %v709
  %v720 = vpop.f32.mrf.mxu0
  %v721 = vadd.f32 0.0, %v720
  %v722 = vpop.f32.mrf.mxu0
  %723 = vdwg.mxu0
  %v724 = vadd.f32 %v708, %v721
  %v725 = vxor.u32 %v724, 2147483648
  %v726 = vmul.f32 %v725, 1.442695
  %v727 = vpow.pop %v726
  %v728 = vadd.f32 %v727, 1.0
  %v729 = vrcp.pop %v728
  %v730 = vmul.f32 %v728, %v729
  %v731 = vsub.f32 1.0, %v730
  %v732 = vmul.f32 %v729, %v731
  %v733 = vadd.f32 %v729, %v732
  %vm734 = vweird.f32 %v728
  %vm735 = vweird.f32 %v729
  %vm736 = vmor %vm734, %vm735
  %v737 = vsel %vm736, %v729, %v733
  %v738 = vand.u32 2147483647, %v728
  %vm739 = vcmp.eq.f32.partialorder %v738, 8.507059e+37
  %v740 = vand.u32 %v728, 2147483648
  %v741 = vor.u32 1.1754944e-38, %v740
  %v742 = vsel %vm739, %v741, %v737
  %v743 = vmul.f32 1.0, %v742
  %v744 = vtanh.pop %v724
  %v745 = vmul.f32 %v743, %v632
  %747 = vrot.lane.b32.xlu0 %v744, 32
  %v748 = vpop.permute.xlu0 %747
  %v750 = vmul.f32 %v743, %v748
  %752 = vrot.lane.b32.xlu0 %v750, 32
  %v753 = vpop.permute.xlu0 %752
  %v755 = vadd.f32 %v745, %v753
  %v756 = vtanh.pop %v755
  %758 = vrot.lane.b32.xlu0 %v756, 32
  %v759 = vpop.permute.xlu0 %758
  %v761 = vmul.f32 %v743, %v759
  %v762 = vpack.c.bf16 %v761, %v761
  %v764 = vunpack.c.l.b16 %v762
  %v765 = vpack.c.b16 %v764, %v764
  %766 = vrot.lane.b32.xlu0 %v765, 64
  %v767 = vpop.permute.xlu0 %766
  %v769 = vunpack.c.l.b16 %v705
  %v770 = vpack.c.b16 %v769, %v769
  %771 = vrot.lane.b32.xlu0 %v770, 96
  %v772 = vpop.permute.xlu0 %771
  %v775 = vsel %vm167, %v767, %v772
  %v776 = vsel %vm395, %v775, 0
  %778 = vmatpush.bf16.msra.mxu0 0
  %779 = vmatpush.bf16.msra.mxu0 0
  %780 = vmatpush.bf16.msra.mxu0 0
  %781 = vmatpush.bf16.msra.mxu0 0
  %782 = vmatpush.bf16.msra.mxu0 %v390
  %783 = vmatpush.bf16.msra.mxu0 %v389
  %784 = vmatpush.bf16.msra.mxu0 %v388
  %785 = vmatpush.bf16.msra.mxu0 %v387
  %786 = vmatmul.bf16.gmra.mxu0 %v776
  %v787 = vpop.f32.mrf.mxu0
  %v788 = vadd.f32 %v369, %v787
  %v789 = vpop.f32.mrf.mxu0
  %790 = vdwg.mxu0
  %v791 = vxor.u32 %v788, 2147483648
  %v792 = vmul.f32 %v791, 1.442695
  %v793 = vpow.pop %v792
  %v794 = vadd.f32 %v793, 1.0
  %v795 = vrcp.pop %v794
  %v796 = vmul.f32 %v794, %v795
  %v797 = vsub.f32 1.0, %v796
  %v798 = vmul.f32 %v795, %v797
  %v799 = vadd.f32 %v795, %v798
  %vm800 = vweird.f32 %v794
  %vm801 = vweird.f32 %v795
  %vm802 = vmor %vm800, %vm801
  %v803 = vsel %vm802, %v795, %v799
  %v804 = vand.u32 2147483647, %v794
  %vm805 = vcmp.eq.f32.partialorder %v804, 8.507059e+37
  %v806 = vand.u32 %v794, 2147483648
  %v807 = vor.u32 1.1754944e-38, %v806
  %v808 = vsel %vm805, %v807, %v803
  %v809 = vmul.f32 1.0, %v808
  %v810 = vtanh.pop %v788
  %v811 = vmul.f32 %v809, %v698
  %813 = vrot.lane.b32.xlu0 %v810, 32
  %v814 = vpop.permute.xlu0 %813
  %v816 = vmul.f32 %v809, %v814
  %818 = vrot.lane.b32.xlu0 %v816, 32
  %v819 = vpop.permute.xlu0 %818
  %v821 = vadd.f32 %v811, %v819
  %v822 = vtanh.pop %v821
  %824 = vrot.lane.b32.xlu0 %v822, 32
  %v825 = vpop.permute.xlu0 %824
  %v827 = vmul.f32 %v809, %v825
  %v828 = vpack.c.bf16 %v827, %v827
  %830 = vrot.lane.b32.xlu0 %v827, 32
  %v831 = vpop.permute.xlu0 %830
  %vm833 = vcmask 1048320
  %834 = vst.msk [vmem:[#allocation3] sm:$0xff] %vm833, %v831
  %v835 = vld [vmem:[#allocation2 + $0x20] sm:$0xff]
  %v836 = vsel %vm167, %v767, 0
  %838 = vmatpush.bf16.msra.mxu0 0
  %839 = vmatpush.bf16.msra.mxu0 0
  %840 = vmatpush.bf16.msra.mxu0 0
  %841 = vmatpush.bf16.msra.mxu0 0
  %842 = vmatpush.bf16.msra.mxu0 0
  %843 = vmatpush.bf16.msra.mxu0 0
  %844 = vmatpush.bf16.msra.mxu0 %v293
  %845 = vmatpush.bf16.msra.mxu0 %v292
  %846 = vmatmul.bf16.gmra.mxu0 %v836
  %v847 = vpop.f32.mrf.mxu0
  %v848 = vadd.f32 0.0, %v847
  %v849 = vpop.f32.mrf.mxu0
  %850 = vdwg.mxu0
  %v851 = vadd.f32 %v835, %v848
  %v852 = vxor.u32 %v851, 2147483648
  %v853 = vmul.f32 %v852, 1.442695
  %v854 = vpow.pop %v853
  %v855 = vadd.f32 %v854, 1.0
  %v856 = vrcp.pop %v855
  %v857 = vmul.f32 %v855, %v856
  %v858 = vsub.f32 1.0, %v857
  %v859 = vmul.f32 %v856, %v858
  %v860 = vadd.f32 %v856, %v859
  %vm861 = vweird.f32 %v855
  %vm862 = vweird.f32 %v856
  %vm863 = vmor %vm861, %vm862
  %v864 = vsel %vm863, %v856, %v860
  %v865 = vand.u32 2147483647, %v855
  %vm866 = vcmp.eq.f32.partialorder %v865, 8.507059e+37
  %v867 = vand.u32 %v855, 2147483648
  %v868 = vor.u32 1.1754944e-38, %v867
  %v869 = vsel %vm866, %v868, %v864
  %v870 = vmul.f32 1.0, %v869
  %v871 = vtanh.pop %v851
  %v872 = vmul.f32 %v870, %v755
  %874 = vrot.lane.b32.xlu0 %v871, 32
  %v875 = vpop.permute.xlu0 %874
  %v877 = vmul.f32 %v870, %v875
  %879 = vrot.lane.b32.xlu0 %v877, 32
  %v880 = vpop.permute.xlu0 %879
  %v882 = vadd.f32 %v872, %v880
  %v883 = vtanh.pop %v882
  %885 = vrot.lane.b32.xlu0 %v883, 32
  %v886 = vpop.permute.xlu0 %885
  %v888 = vmul.f32 %v870, %v886
  %v889 = vpack.c.bf16 %v888, %v888
  %v891 = vunpack.c.l.b16 %v889
  %v892 = vpack.c.b16 %v891, %v891
  %893 = vrot.lane.b32.xlu0 %v892, 64
  %v894 = vpop.permute.xlu0 %893
  %v896 = vunpack.c.l.b16 %v828
  %v897 = vpack.c.b16 %v896, %v896
  %898 = vrot.lane.b32.xlu0 %v897, 96
  %v899 = vpop.permute.xlu0 %898
  %v902 = vsel %vm167, %v894, %v899
  %v903 = vsel %vm395, %v902, 0
  %905 = vmatpush.bf16.msra.mxu0 0
  %906 = vmatpush.bf16.msra.mxu0 0
  %907 = vmatpush.bf16.msra.mxu0 0
  %908 = vmatpush.bf16.msra.mxu0 0
  %909 = vmatpush.bf16.msra.mxu0 %v390
  %910 = vmatpush.bf16.msra.mxu0 %v389
  %911 = vmatpush.bf16.msra.mxu0 %v388
  %912 = vmatpush.bf16.msra.mxu0 %v387
  %913 = vmatmul.bf16.gmra.mxu0 %v903
  %v914 = vpop.f32.mrf.mxu0
  %v915 = vadd.f32 %v369, %v914
  %v916 = vpop.f32.mrf.mxu0
  %917 = vdwg.mxu0
  %v918 = vxor.u32 %v915, 2147483648
  %v919 = vmul.f32 %v918, 1.442695
  %v920 = vpow.pop %v919
  %v921 = vadd.f32 %v920, 1.0
  %v922 = vrcp.pop %v921
  %v923 = vmul.f32 %v921, %v922
  %v924 = vsub.f32 1.0, %v923
  %v925 = vmul.f32 %v922, %v924
  %v926 = vadd.f32 %v922, %v925
  %vm927 = vweird.f32 %v921
  %vm928 = vweird.f32 %v922
  %vm929 = vmor %vm927, %vm928
  %v930 = vsel %vm929, %v922, %v926
  %v931 = vand.u32 2147483647, %v921
  %vm932 = vcmp.eq.f32.partialorder %v931, 8.507059e+37
  %v933 = vand.u32 %v921, 2147483648
  %v934 = vor.u32 1.1754944e-38, %v933
  %v935 = vsel %vm932, %v934, %v930
  %v936 = vmul.f32 1.0, %v935
  %v937 = vtanh.pop %v915
  %v938 = vmul.f32 %v936, %v821
  %940 = vrot.lane.b32.xlu0 %v937, 32
  %v941 = vpop.permute.xlu0 %940
  %v943 = vmul.f32 %v936, %v941
  %945 = vrot.lane.b32.xlu0 %v943, 32
  %v946 = vpop.permute.xlu0 %945
  %v948 = vadd.f32 %v938, %v946
  %v949 = vtanh.pop %v948
  %951 = vrot.lane.b32.xlu0 %v949, 32
  %v952 = vpop.permute.xlu0 %951
  %v954 = vmul.f32 %v936, %v952
  %v955 = vpack.c.bf16 %v954, %v954
  %957 = vrot.lane.b32.xlu0 %v954, 64
  %v958 = vpop.permute.xlu0 %957
  %960 = vst.msk [vmem:[#allocation3 + $0x8] sm:$0xff] %vm167, %v958
  %v961 = vld [vmem:[#allocation2 + $0x28] sm:$0xff]
  %v962 = vsel %vm167, %v894, 0
  %964 = vmatpush.bf16.msra.mxu0 0
  %965 = vmatpush.bf16.msra.mxu0 0
  %966 = vmatpush.bf16.msra.mxu0 0
  %967 = vmatpush.bf16.msra.mxu0 0
  %968 = vmatpush.bf16.msra.mxu0 0
  %969 = vmatpush.bf16.msra.mxu0 0
  %970 = vmatpush.bf16.msra.mxu0 %v293
  %971 = vmatpush.bf16.msra.mxu0 %v292
  %972 = vmatmul.bf16.gmra.mxu0 %v962
  %v973 = vpop.f32.mrf.mxu0
  %v974 = vadd.f32 0.0, %v973
  %v975 = vpop.f32.mrf.mxu0
  %976 = vdwg.mxu0
  %v977 = vadd.f32 %v961, %v974
  %v978 = vxor.u32 %v977, 2147483648
  %v979 = vmul.f32 %v978, 1.442695
  %v980 = vpow.pop %v979
  %v981 = vadd.f32 %v980, 1.0
  %v982 = vrcp.pop %v981
  %v983 = vmul.f32 %v981, %v982
  %v984 = vsub.f32 1.0, %v983
  %v985 = vmul.f32 %v982, %v984
  %v986 = vadd.f32 %v982, %v985
  %vm987 = vweird.f32 %v981
  %vm988 = vweird.f32 %v982
  %vm989 = vmor %vm987, %vm988
  %v990 = vsel %vm989, %v982, %v986
  %v991 = vand.u32 2147483647, %v981
  %vm992 = vcmp.eq.f32.partialorder %v991, 8.507059e+37
  %v993 = vand.u32 %v981, 2147483648
  %v994 = vor.u32 1.1754944e-38, %v993
  %v995 = vsel %vm992, %v994, %v990
  %v996 = vmul.f32 1.0, %v995
  %v997 = vtanh.pop %v977
  %v998 = vmul.f32 %v996, %v882
  %1000 = vrot.lane.b32.xlu0 %v997, 32
  %v1001 = vpop.permute.xlu0 %1000
  %v1003 = vmul.f32 %v996, %v1001
  %1005 = vrot.lane.b32.xlu0 %v1003, 32
  %v1006 = vpop.permute.xlu0 %1005
  %v1008 = vadd.f32 %v998, %v1006
  %v1009 = vtanh.pop %v1008
  %1011 = vrot.lane.b32.xlu0 %v1009, 32
  %v1012 = vpop.permute.xlu0 %1011
  %v1014 = vmul.f32 %v996, %v1012
  %v1015 = vpack.c.bf16 %v1014, %v1014
  %v1017 = vunpack.c.l.b16 %v1015
  %v1018 = vpack.c.b16 %v1017, %v1017
  %1019 = vrot.lane.b32.xlu0 %v1018, 64
  %v1020 = vpop.permute.xlu0 %1019
  %v1022 = vunpack.c.l.b16 %v955
  %v1023 = vpack.c.b16 %v1022, %v1022
  %1024 = vrot.lane.b32.xlu0 %v1023, 96
  %v1025 = vpop.permute.xlu0 %1024
  %v1028 = vsel %vm167, %v1020, %v1025
  %v1029 = vsel %vm395, %v1028, 0
  %1031 = vmatpush.bf16.msra.mxu0 0
  %1032 = vmatpush.bf16.msra.mxu0 0
  %1033 = vmatpush.bf16.msra.mxu0 0
  %1034 = vmatpush.bf16.msra.mxu0 0
  %1035 = vmatpush.bf16.msra.mxu0 %v390
  %1036 = vmatpush.bf16.msra.mxu0 %v389
  %1037 = vmatpush.bf16.msra.mxu0 %v388
  %1038 = vmatpush.bf16.msra.mxu0 %v387
  %1039 = vmatmul.bf16.gmra.mxu0 %v1029
  %v1040 = vpop.f32.mrf.mxu0
  %v1041 = vadd.f32 %v369, %v1040
  %v1042 = vpop.f32.mrf.mxu0
  %1043 = vdwg.mxu0
  %v1044 = vxor.u32 %v1041, 2147483648
  %v1045 = vmul.f32 %v1044, 1.442695
  %v1046 = vpow.pop %v1045
  %v1047 = vadd.f32 %v1046, 1.0
  %v1048 = vrcp.pop %v1047
  %v1049 = vmul.f32 %v1047, %v1048
  %v1050 = vsub.f32 1.0, %v1049
  %v1051 = vmul.f32 %v1048, %v1050
  %v1052 = vadd.f32 %v1048, %v1051
  %vm1053 = vweird.f32 %v1047
  %vm1054 = vweird.f32 %v1048
  %vm1055 = vmor %vm1053, %vm1054
  %v1056 = vsel %vm1055, %v1048, %v1052
  %v1057 = vand.u32 2147483647, %v1047
  %vm1058 = vcmp.eq.f32.partialorder %v1057, 8.507059e+37
  %v1059 = vand.u32 %v1047, 2147483648
  %v1060 = vor.u32 1.1754944e-38, %v1059
  %v1061 = vsel %vm1058, %v1060, %v1056
  %v1062 = vmul.f32 1.0, %v1061
  %v1063 = vtanh.pop %v1041
  %v1064 = vmul.f32 %v1062, %v948
  %1066 = vrot.lane.b32.xlu0 %v1063, 32
  %v1067 = vpop.permute.xlu0 %1066
  %v1069 = vmul.f32 %v1062, %v1067
  %1071 = vrot.lane.b32.xlu0 %v1069, 32
  %v1072 = vpop.permute.xlu0 %1071
  %v1074 = vadd.f32 %v1064, %v1072
  %v1075 = vtanh.pop %v1074
  %1077 = vrot.lane.b32.xlu0 %v1075, 32
  %v1078 = vpop.permute.xlu0 %1077
  %v1080 = vmul.f32 %v1062, %v1078
  %v1081 = vpack.c.bf16 %v1080, %v1080
  %1083 = vrot.lane.b32.xlu0 %v1080, 96
  %v1084 = vpop.permute.xlu0 %1083
  %1086 = vst.msk [vmem:[#allocation3 + $0x8] sm:$0xff] %vm583, %v1084
  %v1087 = vld [vmem:[#allocation2 + $0x30] sm:$0xff]
  %v1088 = vsel %vm167, %v1020, 0
  %1090 = vmatpush.bf16.msra.mxu0 0
  %1091 = vmatpush.bf16.msra.mxu0 0
  %1092 = vmatpush.bf16.msra.mxu0 0
  %1093 = vmatpush.bf16.msra.mxu0 0
  %1094 = vmatpush.bf16.msra.mxu0 0
  %1095 = vmatpush.bf16.msra.mxu0 0
  %1096 = vmatpush.bf16.msra.mxu0 %v293
  %1097 = vmatpush.bf16.msra.mxu0 %v292
  %1098 = vmatmul.bf16.gmra.mxu0 %v1088
  %v1099 = vpop.f32.mrf.mxu0
  %v1100 = vadd.f32 0.0, %v1099
  %v1101 = vpop.f32.mrf.mxu0
  %1102 = vdwg.mxu0
  %v1103 = vadd.f32 %v1087, %v1100
  %v1104 = vxor.u32 %v1103, 2147483648
  %v1105 = vmul.f32 %v1104, 1.442695
  %v1106 = vpow.pop %v1105
  %v1107 = vadd.f32 %v1106, 1.0
  %v1108 = vrcp.pop %v1107
  %v1109 = vmul.f32 %v1107, %v1108
  %v1110 = vsub.f32 1.0, %v1109
  %v1111 = vmul.f32 %v1108, %v1110
  %v1112 = vadd.f32 %v1108, %v1111
  %vm1113 = vweird.f32 %v1107
  %vm1114 = vweird.f32 %v1108
  %vm1115 = vmor %vm1113, %vm1114
  %v1116 = vsel %vm1115, %v1108, %v1112
  %v1117 = vand.u32 2147483647, %v1107
  %vm1118 = vcmp.eq.f32.partialorder %v1117, 8.507059e+37
  %v1119 = vand.u32 %v1107, 2147483648
  %v1120 = vor.u32 1.1754944e-38, %v1119
  %v1121 = vsel %vm1118, %v1120, %v1116
  %v1122 = vmul.f32 1.0, %v1121
  %v1123 = vtanh.pop %v1103
  %v1124 = vmul.f32 %v1122, %v1008
  %1126 = vrot.lane.b32.xlu0 %v1123, 32
  %v1127 = vpop.permute.xlu0 %1126
  %v1129 = vmul.f32 %v1122, %v1127
  %1131 = vrot.lane.b32.xlu0 %v1129, 32
  %v1132 = vpop.permute.xlu0 %1131
  %v1134 = vadd.f32 %v1124, %v1132
  %v1135 = vtanh.pop %v1134
  %1137 = vrot.lane.b32.xlu0 %v1135, 32
  %v1138 = vpop.permute.xlu0 %1137
  %v1140 = vmul.f32 %v1122, %v1138
  %v1141 = vpack.c.bf16 %v1140, %v1140
  %v1143 = vunpack.c.l.b16 %v1141
  %v1144 = vpack.c.b16 %v1143, %v1143
  %1145 = vrot.lane.b32.xlu0 %v1144, 64
  %v1146 = vpop.permute.xlu0 %1145
  %v1148 = vunpack.c.l.b16 %v1081
  %v1149 = vpack.c.b16 %v1148, %v1148
  %1150 = vrot.lane.b32.xlu0 %v1149, 96
  %v1151 = vpop.permute.xlu0 %1150
  %v1154 = vsel %vm167, %v1146, %v1151
  %v1155 = vsel %vm395, %v1154, 0
  %1157 = vmatpush.bf16.msra.mxu0 0
  %1158 = vmatpush.bf16.msra.mxu0 0
  %1159 = vmatpush.bf16.msra.mxu0 0
  %1160 = vmatpush.bf16.msra.mxu0 0
  %1161 = vmatpush.bf16.msra.mxu0 %v390
  %1162 = vmatpush.bf16.msra.mxu0 %v389
  %1163 = vmatpush.bf16.msra.mxu0 %v388
  %1164 = vmatpush.bf16.msra.mxu0 %v387
  %1165 = vmatmul.bf16.gmra.mxu0 %v1155
  %v1166 = vpop.f32.mrf.mxu0
  %v1167 = vadd.f32 %v369, %v1166
  %v1168 = vpop.f32.mrf.mxu0
  %1169 = vdwg.mxu0
  %v1170 = vxor.u32 %v1167, 2147483648
  %v1171 = vmul.f32 %v1170, 1.442695
  %v1172 = vpow.pop %v1171
  %v1173 = vadd.f32 %v1172, 1.0
  %v1174 = vrcp.pop %v1173
  %v1175 = vmul.f32 %v1173, %v1174
  %v1176 = vsub.f32 1.0, %v1175
  %v1177 = vmul.f32 %v1174, %v1176
  %v1178 = vadd.f32 %v1174, %v1177
  %vm1179 = vweird.f32 %v1173
  %vm1180 = vweird.f32 %v1174
  %vm1181 = vmor %vm1179, %vm1180
  %v1182 = vsel %vm1181, %v1174, %v1178
  %v1183 = vand.u32 2147483647, %v1173
  %vm1184 = vcmp.eq.f32.partialorder %v1183, 8.507059e+37
  %v1185 = vand.u32 %v1173, 2147483648
  %v1186 = vor.u32 1.1754944e-38, %v1185
  %v1187 = vsel %vm1184, %v1186, %v1182
  %v1188 = vmul.f32 1.0, %v1187
  %v1189 = vtanh.pop %v1167
  %v1190 = vmul.f32 %v1188, %v1074
  %1192 = vrot.lane.b32.xlu0 %v1189, 32
  %v1193 = vpop.permute.xlu0 %1192
  %v1195 = vmul.f32 %v1188, %v1193
  %1197 = vrot.lane.b32.xlu0 %v1195, 32
  %v1198 = vpop.permute.xlu0 %1197
  %v1200 = vadd.f32 %v1190, %v1198
  %v1201 = vtanh.pop %v1200
  %1203 = vrot.lane.b32.xlu0 %v1201, 32
  %v1204 = vpop.permute.xlu0 %1203
  %v1206 = vmul.f32 %v1188, %v1204
  %v1207 = vpack.c.bf16 %v1206, %v1206
  %1208 = vst.msk [vmem:[#allocation3 + $0x8] sm:$0xff] %vm706, %v1206
  %v1209 = vld [vmem:[#allocation2 + $0x38] sm:$0xff]
  %v1210 = vsel %vm167, %v1146, 0
  %1212 = vmatpush.bf16.msra.mxu0 0
  %1213 = vmatpush.bf16.msra.mxu0 0
  %1214 = vmatpush.bf16.msra.mxu0 0
  %1215 = vmatpush.bf16.msra.mxu0 0
  %1216 = vmatpush.bf16.msra.mxu0 0
  %1217 = vmatpush.bf16.msra.mxu0 0
  %1218 = vmatpush.bf16.msra.mxu0 %v293
  %1219 = vmatpush.bf16.msra.mxu0 %v292
  %1220 = vmatmul.bf16.gmra.mxu0 %v1210
  %v1221 = vpop.f32.mrf.mxu0
  %v1222 = vadd.f32 0.0, %v1221
  %v1223 = vpop.f32.mrf.mxu0
  %1224 = vdwg.mxu0
  %v1225 = vadd.f32 %v1209, %v1222
  %v1226 = vxor.u32 %v1225, 2147483648
  %v1227 = vmul.f32 %v1226, 1.442695
  %v1228 = vpow.pop %v1227
  %v1229 = vadd.f32 %v1228, 1.0
  %v1230 = vrcp.pop %v1229
  %v1231 = vmul.f32 %v1229, %v1230
  %v1232 = vsub.f32 1.0, %v1231
  %v1233 = vmul.f32 %v1230, %v1232
  %v1234 = vadd.f32 %v1230, %v1233
  %vm1235 = vweird.f32 %v1229
  %vm1236 = vweird.f32 %v1230
  %vm1237 = vmor %vm1235, %vm1236
  %v1238 = vsel %vm1237, %v1230, %v1234
  %v1239 = vand.u32 2147483647, %v1229
  %vm1240 = vcmp.eq.f32.partialorder %v1239, 8.507059e+37
  %v1241 = vand.u32 %v1229, 2147483648
  %v1242 = vor.u32 1.1754944e-38, %v1241
  %v1243 = vsel %vm1240, %v1242, %v1238
  %v1244 = vmul.f32 1.0, %v1243
  %v1245 = vtanh.pop %v1225
  %v1246 = vmul.f32 %v1244, %v1134
  %1248 = vrot.lane.b32.xlu0 %v1245, 32
  %v1249 = vpop.permute.xlu0 %1248
  %v1251 = vmul.f32 %v1244, %v1249
  %1253 = vrot.lane.b32.xlu0 %v1251, 32
  %v1254 = vpop.permute.xlu0 %1253
  %v1256 = vadd.f32 %v1246, %v1254
  %v1257 = vtanh.pop %v1256
  %1259 = vrot.lane.b32.xlu0 %v1257, 32
  %v1260 = vpop.permute.xlu0 %1259
  %v1262 = vmul.f32 %v1244, %v1260
  %v1263 = vpack.c.bf16 %v1262, %v1262
  %v1265 = vunpack.c.l.b16 %v1263
  %v1266 = vpack.c.b16 %v1265, %v1265
  %1267 = vrot.lane.b32.xlu0 %v1266, 64
  %v1268 = vpop.permute.xlu0 %1267
  %v1270 = vunpack.c.l.b16 %v1207
  %v1271 = vpack.c.b16 %v1270, %v1270
  %1272 = vrot.lane.b32.xlu0 %v1271, 96
  %v1273 = vpop.permute.xlu0 %1272
  %v1276 = vsel %vm167, %v1268, %v1273
  %v1277 = vsel %vm395, %v1276, 0
  %1279 = vmatpush.bf16.msra.mxu0 0
  %1280 = vmatpush.bf16.msra.mxu0 0
  %1281 = vmatpush.bf16.msra.mxu0 0
  %1282 = vmatpush.bf16.msra.mxu0 0
  %1283 = vmatpush.bf16.msra.mxu0 %v390
  %1284 = vmatpush.bf16.msra.mxu0 %v389
  %1285 = vmatpush.bf16.msra.mxu0 %v388
  %1286 = vmatpush.bf16.msra.mxu0 %v387
  %1287 = vmatmul.bf16.gmra.mxu0 %v1277
  %v1288 = vpop.f32.mrf.mxu0
  %v1289 = vadd.f32 %v369, %v1288
  %v1290 = vpop.f32.mrf.mxu0
  %1291 = vdwg.mxu0
  %v1292 = vxor.u32 %v1289, 2147483648
  %v1293 = vmul.f32 %v1292, 1.442695
  %v1294 = vpow.pop %v1293
  %v1295 = vadd.f32 %v1294, 1.0
  %v1296 = vrcp.pop %v1295
  %v1297 = vmul.f32 %v1295, %v1296
  %v1298 = vsub.f32 1.0, %v1297
  %v1299 = vmul.f32 %v1296, %v1298
  %v1300 = vadd.f32 %v1296, %v1299
  %vm1301 = vweird.f32 %v1295
  %vm1302 = vweird.f32 %v1296
  %vm1303 = vmor %vm1301, %vm1302
  %v1304 = vsel %vm1303, %v1296, %v1300
  %v1305 = vand.u32 2147483647, %v1295
  %vm1306 = vcmp.eq.f32.partialorder %v1305, 8.507059e+37
  %v1307 = vand.u32 %v1295, 2147483648
  %v1308 = vor.u32 1.1754944e-38, %v1307
  %v1309 = vsel %vm1306, %v1308, %v1304
  %v1310 = vmul.f32 1.0, %v1309
  %v1311 = vtanh.pop %v1289
  %v1312 = vmul.f32 %v1310, %v1200
  %1314 = vrot.lane.b32.xlu0 %v1311, 32
  %v1315 = vpop.permute.xlu0 %1314
  %v1317 = vmul.f32 %v1310, %v1315
  %1319 = vrot.lane.b32.xlu0 %v1317, 32
  %v1320 = vpop.permute.xlu0 %1319
  %v1322 = vadd.f32 %v1312, %v1320
  %v1323 = vtanh.pop %v1322
  %1325 = vrot.lane.b32.xlu0 %v1323, 32
  %v1326 = vpop.permute.xlu0 %1325
  %v1328 = vmul.f32 %v1310, %v1326
  %1330 = vrot.lane.b32.xlu0 %v1328, 32
  %v1331 = vpop.permute.xlu0 %1330
  %1333 = vst.msk [vmem:[#allocation3 + $0x8] sm:$0xff] %vm833, %v1331
  %v1334 = vld [vmem:[#allocation3] sm:$0xff]
  %v1335 = vld [vmem:[#allocation3 + $0x8] sm:$0xff]
  %v1336 = vpack.c.bf16 %v1334, %v1334
  %v1337 = vpack.c.bf16 %v1335, %v1335
  %v1338 = vld [vmem:[%s12] sm:$0xf]
  %v1339 = vld [vmem:[%s12 + $0x4] sm:$0xf]
  %v1340 = vld [vmem:[%s12 + $0x8] sm:$0xf]
  %v1341 = vld [vmem:[%s12 + $0xc] sm:$0xf]
  %v1342 = vld [vmem:[%s12 + $0x10] sm:$0xf]
  %v1343 = vld [vmem:[%s12 + $0x14] sm:$0xf]
  %v1344 = vld [vmem:[%s12 + $0x18] sm:$0xf]
  %v1345 = vld [vmem:[%s12 + $0x1c] sm:$0xf]
  %v1346 = vld [vmem:[%s12 + $0x20] sm:$0xf]
  %v1347 = vld [vmem:[%s12 + $0x24] sm:$0xf]
  %v1348 = vld [vmem:[%s12 + $0x28] sm:$0xf]
  %v1349 = vld [vmem:[%s12 + $0x2c] sm:$0xf]
  %v1350 = vld [vmem:[%s12 + $0x30] sm:$0xf]
  %v1351 = vld [vmem:[%s12 + $0x34] sm:$0xf]
  %v1352 = vld [vmem:[%s12 + $0x38] sm:$0xf]
  %v1353 = vld [vmem:[%s12 + $0x3c] sm:$0xf]
  %v1354 = vld [vmem:[%s12 + $0x40] sm:$0xf]
  %v1355 = vld [vmem:[%s12 + $0x44] sm:$0xf]
  %v1356 = vld [vmem:[%s12 + $0x48] sm:$0xf]
  %v1357 = vld [vmem:[%s12 + $0x4c] sm:$0xf]
  %v1358 = vld [vmem:[%s12 + $0x50] sm:$0xf]
  %v1359 = vld [vmem:[%s12 + $0x54] sm:$0xf]
  %v1360 = vld [vmem:[%s12 + $0x58] sm:$0xf]
  %v1361 = vld [vmem:[%s12 + $0x5c] sm:$0xf]
  %v1362 = vld [vmem:[%s12 + $0x60] sm:$0xf]
  %v1363 = vld [vmem:[%s12 + $0x64] sm:$0xf]
  %v1364 = vld [vmem:[%s12 + $0x68] sm:$0xf]
  %v1365 = vld [vmem:[%s12 + $0x6c] sm:$0xf]
  %v1366 = vld [vmem:[%s12 + $0x70] sm:$0xf]
  %v1367 = vld [vmem:[%s12 + $0x74] sm:$0xf]
  %v1368 = vld [vmem:[%s12 + $0x78] sm:$0xf]
  %v1369 = vld [vmem:[%s12 + $0x7c] sm:$0xf]
  %v1402 = vunpack.c.l.b16 %v1338
  %v1403 = vunpack.c.l.b16 %v1339
  %v1404 = vunpack.c.l.b16 %v1340
  %v1405 = vunpack.c.l.b16 %v1341
  %v1406 = vunpack.c.l.b16 %v1342
  %v1407 = vunpack.c.l.b16 %v1343
  %v1408 = vunpack.c.l.b16 %v1344
  %v1409 = vunpack.c.l.b16 %v1345
  %v1410 = vunpack.c.l.b16 %v1346
  %v1411 = vunpack.c.l.b16 %v1347
  %v1412 = vunpack.c.l.b16 %v1348
  %v1413 = vunpack.c.l.b16 %v1349
  %v1414 = vunpack.c.l.b16 %v1350
  %v1415 = vunpack.c.l.b16 %v1351
  %v1416 = vunpack.c.l.b16 %v1352
  %v1417 = vunpack.c.l.b16 %v1353
  %v1418 = vunpack.c.l.b16 %v1354
  %v1419 = vunpack.c.l.b16 %v1355
  %v1420 = vunpack.c.l.b16 %v1356
  %v1421 = vunpack.c.l.b16 %v1357
  %v1422 = vunpack.c.l.b16 %v1358
  %v1423 = vunpack.c.l.b16 %v1359
  %v1424 = vunpack.c.l.b16 %v1360
  %v1425 = vunpack.c.l.b16 %v1361
  %v1426 = vunpack.c.l.b16 %v1362
  %v1427 = vunpack.c.l.b16 %v1363
  %v1428 = vunpack.c.l.b16 %v1364
  %v1429 = vunpack.c.l.b16 %v1365
  %v1430 = vunpack.c.l.b16 %v1366
  %v1431 = vunpack.c.l.b16 %v1367
  %v1432 = vunpack.c.l.b16 %v1368
  %v1433 = vunpack.c.l.b16 %v1369
  %v1434 = vpack.c.b16 %v1403, %v1402
  %v1435 = vpack.c.b16 %v1405, %v1404
  %v1436 = vpack.c.b16 %v1407, %v1406
  %v1437 = vpack.c.b16 %v1409, %v1408
  %v1438 = vpack.c.b16 %v1411, %v1410
  %v1439 = vpack.c.b16 %v1413, %v1412
  %v1440 = vpack.c.b16 %v1415, %v1414
  %v1441 = vpack.c.b16 %v1417, %v1416
  %v1442 = vpack.c.b16 %v1419, %v1418
  %v1443 = vpack.c.b16 %v1421, %v1420
  %v1444 = vpack.c.b16 %v1423, %v1422
  %v1445 = vpack.c.b16 %v1425, %v1424
  %v1446 = vpack.c.b16 %v1427, %v1426
  %v1447 = vpack.c.b16 %v1429, %v1428
  %v1448 = vpack.c.b16 %v1431, %v1430
  %v1449 = vpack.c.b16 %v1433, %v1432
  %1466 = vmatpush.bf16.msra.mxu0 %v1441
  %1467 = vmatpush.bf16.msra.mxu0 %v1440
  %1468 = vmatpush.bf16.msra.mxu0 %v1439
  %1469 = vmatpush.bf16.msra.mxu0 %v1438
  %1470 = vmatpush.bf16.msra.mxu0 %v1437
  %1471 = vmatpush.bf16.msra.mxu0 %v1436
  %1472 = vmatpush.bf16.msra.mxu0 %v1435
  %1473 = vmatpush.bf16.msra.mxu0 %v1434
  %1474 = vmatmul.bf16.gmra.mxu0 %v1336
  %v1475 = vpop.f32.mrf.mxu0
  %v1476 = vadd.f32 0.0, %v1475
  %v1477 = vpop.f32.mrf.mxu0
  %1478 = vdwg.mxu0
  %1479 = vmatpush.bf16.msra.mxu0 %v1449
  %1480 = vmatpush.bf16.msra.mxu0 %v1448
  %1481 = vmatpush.bf16.msra.mxu0 %v1447
  %1482 = vmatpush.bf16.msra.mxu0 %v1446
  %1483 = vmatpush.bf16.msra.mxu0 %v1445
  %1484 = vmatpush.bf16.msra.mxu0 %v1444
  %1485 = vmatpush.bf16.msra.mxu0 %v1443
  %1486 = vmatpush.bf16.msra.mxu0 %v1442
  %1487 = vmatmul.bf16.gmra.mxu0 %v1337
  %v1488 = vpop.f32.mrf.mxu0
  %v1489 = vadd.f32 %v1476, %v1488
  %v1490 = vpop.f32.mrf.mxu0
  %1491 = vdwg.mxu0
  %v1492 = vadd.f32 %v259, %v1489
  %vm1493 = vcmask 31744
  %1494 = vst.msk [vmem:[%s15] sm:$0xff] %vm1493, %v1492
  %1496 = vrot.lane.b32.xlu0 %v1262, 64
  %v1497 = vpop.permute.xlu0 %1496
  %1499 = vst.msk [vmem:[%s16] sm:$0xff] %vm167, %v1497
  %1501 = vrot.lane.b32.xlu0 %v1256, 96
  %v1502 = vpop.permute.xlu0 %1501
  %1504 = vst.msk [vmem:[%s17] sm:$0xff] %vm167, %v1502
  %1505 = vrot.lane.b32.xlu0 %v1328, 64
  %v1506 = vpop.permute.xlu0 %1505
  %s1508 = scalar_lea.vmem %s16, 8
  %1509 = vst.msk [vmem:[%s1508] sm:$0xff] %vm167, %v1506
  %1511 = vrot.lane.b32.xlu0 %v1322, 96
  %v1512 = vpop.permute.xlu0 %1511
  %s1514 = scalar_lea.vmem %s17, 8
  %1515 = vst.msk [vmem:[%s1514] sm:$0xff] %vm167, %v1512
  // Predicated region
  $region62: #{forward.1} parent=0 // pred_check
    _
  $region63: #{forward.1} parent=0 // pred_check_branch
    %1517 = sbr.rel (0) target = $region65
  $region64: #{forward.1} parent=0 // pred_region
    _
  $region65: #{forward.1} parent=0 // pred_fallthru
    _
  // Predicated region
  $region66: #{forward.1} parent=0 // pred_check
    _
  $region67: #{forward.1} parent=0 // pred_check_branch
    %1519 = sbr.rel (0) target = $region69
  $region68: #{forward.1} parent=0 // pred_region
    _
  $region69: #{forward.1} parent=0 // pred_fallthru
    _
  // Predicated region
  $region70: #{forward.1} parent=0 // pred_check
    _
  $region71: #{forward.1} parent=0 // pred_check_branch
    %1521 = sbr.rel (0) target = $region73
  $region72: #{forward.1} parent=0 // pred_region
    _
  $region73: #{forward.1} parent=0 // pred_fallthru
    _
  // Predicated region
  $region74: #{forward.1} parent=0 // pred_check
    _
  $region75: #{forward.1} parent=0 // pred_check_branch
    %1523 = sbr.rel (0) target = $region77
  $region76: #{forward.1} parent=0 // pred_region
    _
  $region77: #{forward.1} parent=0 // pred_fallthru
    _
  // Predicated region
  $region78: #{forward.1} parent=0 // pred_check
    _
  $region79: #{forward.1} parent=0 // pred_check_branch
    %1525 = sbr.rel (0) target = $region81
  $region80: #{forward.1} parent=0 // pred_region
    _
  $region81: #{forward.1} parent=0 // pred_fallthru
    _
  // Predicated region
  $region82: #{forward.1} parent=0 // pred_check
    _
  $region83: #{forward.1} parent=0 // pred_check_branch
    %1527 = sbr.rel (0) target = $region85
  $region84: #{forward.1} parent=0 // pred_region
    _
  $region85: #{forward.1} parent=0 // pred_fallthru
    _

</llo_original>
